<compile_context>
chip_gen: v7x
topology: tpu7x:2x2x1
jax: 0.10.0
libtpu: 0.0.40
codegen_flags: <defaults>
</compile_context>

<pallas_src>
from functools import partial

import jax
import jax.numpy as jnp
from jax.experimental import pallas as pl
from jax.experimental.pallas import tpu as pltpu


# --------------------------------------------------------------------------------------
# Helpers
# --------------------------------------------------------------------------------------
def _round_up(x, m):
    return ((x + m - 1) // m) * m


def _vmem_capacity_bytes():
    try:
        info = pltpu.get_tpu_info()
        v = getattr(info, "vmem_capacity_bytes", None)
        if v:
            return int(v)
    except Exception:
        pass
    return 64 << 20  # conservative fallback (v7x per-core VMEM)


def _num_tensorcores():
    # Best-effort detection of TensorCores per chip (v7x megacore = 2, v5e/v6e = 1).
    try:
        info = pltpu.get_tpu_info()
        for name in ("num_cores", "core_count", "num_tensorcores", "tensor_cores"):
            v = getattr(info, name, None)
            if v:
                return max(1, int(v))
    except Exception:
        pass
    return 1  # TODO(synk): plumb an explicit flag for v7x if auto-detection is unavailable.


def _fused_projection_weights(w1, w2, w3):
    """Fold the three small projections into two (F*T, T) matmul weights (f32).

    W12[(f,t), s] = W_2[f, s] * W_1[t]   so  x2d @ W12 == (x @ W_1) @ W_2
    W3e[(f,t), s] = W_3[f] * delta[t, s] so  x2d @ W3e == (W_3 . x) transposed per batch
    """
    feats, frames = w2.shape
    w1f = w1.astype(jnp.float32)
    w2f = w2.astype(jnp.float32)
    w3f = w3.astype(jnp.float32)
    w12 = (w2f[:, None, :] * w1f[None, :, None]).reshape(feats * frames, frames)
    w3e = (w3f[:, None, None] * jnp.eye(frames, dtype=jnp.float32)[None, :, :]
           ).reshape(feats * frames, frames)
    return w12, w3e


# --------------------------------------------------------------------------------------
# Kernel
# --------------------------------------------------------------------------------------
def _spatial_attention_kernel(x_ref, w12_ref, w3e_ref, bst_ref, vst_ref, out_ref,
                              *, Bb, Np, N, T):
    # x_ref:    (Bb*Np, F*T)   lane-dense slab for this batch block (mxu dtype)
    # w12_ref:  (F*T, T)       fused (x@W1)@W2 weight
    # w3e_ref:  (F*T, T)       fused W3.x weight
    # bst_ref:  (Np, Np) f32   b_s transposed: bst[j, i] = b_s[0, i, j] (zero padded)
    # vst_ref:  (Np, Np)       V_s transposed: vst[i, a] = V_s[a, i]   (zero padded)
    # out_ref:  (Bb*Np, Np)    module orientation: out[(b, a), j] = softmax_a(S)[b, a, j]
    mxu_dtype = x_ref.dtype
    x2d = x_ref[...]                                               # (Bb*Np, F*T)

    # Two lane-aligned projection matmuls (no mid-vreg slicing of a fused result).
    lhs = jnp.dot(x2d, w12_ref[...], preferred_element_type=jnp.float32)   # (Bb*Np, T)
    rhs = jnp.dot(x2d, w3e_ref[...], preferred_element_type=jnp.float32)   # (Bb*Np, T)
    lhs3 = lhs.reshape(Bb, Np, T).astype(mxu_dtype)
    rhs3 = rhs.reshape(Bb, Np, T).astype(mxu_dtype)

    # product^T[b, j, i] = sum_t rhs[b,j,t] * lhs[b,i,t]  (single batched MXU dot, f32 acc)
    # TODO(synk): both operands carry the contraction (T) on the lane axis, so Mosaic may
    # insert a per-batch (Np, T) transpose; T is tiny so this is accepted -- verify with
    # pl.lower_as_mlir / bundle dump if the XLU slot becomes the bottleneck at large N.
    prod_t = jnp.einsum('bjt,bit->bji', rhs3, lhs3,
                        preferred_element_type=jnp.float32)        # (Bb, Np, Np)

    # Bias add + sigmoid stay in f32 (v5e has no bf16 VPU/EUP).
    sig_t = jax.nn.sigmoid(prod_t + bst_ref[...])                  # (Bb, Np, Np) f32

    # S^T[(b,j), a] = sum_i sig^T[b,j,i] * V_s[a,i]  -> ONE (Bb*Np, Np) x (Np, Np) matmul.
    s_flat = jnp.dot(sig_t.astype(mxu_dtype).reshape(Bb * Np, Np), vst_ref[...],
                     preferred_element_type=jnp.float32)           # (Bb*Np, Np)

    # Softmax over the original dim=1 ('a'), which is the lane axis here.
    if Np != N:  # mask padded 'a' lanes so they don't pollute max / denominator
        a_valid = jax.lax.broadcasted_iota(jnp.int32, (1, Np), 1) < N
        s_flat = jnp.where(a_valid, s_flat, -1e30)
    s_flat = s_flat - jnp.max(s_flat, axis=1, keepdims=True)
    e = jnp.exp(s_flat)
    # NOTE: approx reciprocal (EUP vrcp) -> rows sum to 1 only to ~1e-3.
    inv = pl.reciprocal(jnp.sum(e, axis=1, keepdims=True), approx=True)
    probs = e * inv                                                # rows (b, j), lanes a

    # Per-batch minor transpose (XLU vxpose of a 128-aligned f32 tile) so the stored
    # layout is already the module's (b, a, j) -- removes the wrapper HBM transpose.
    for b in range(Bb):
        blk = probs[b * Np:(b + 1) * Np, :]                        # (Np_j, Np_a)
        out_ref[b * Np:(b + 1) * Np, :] = blk.T.astype(out_ref.dtype)


# --------------------------------------------------------------------------------------
# Wrapper
# --------------------------------------------------------------------------------------
def spatial_attention(x, w1, w2, w3, b_s, v_s, *,
                      mxu_dtype=jnp.bfloat16, batch_block=None, num_cores=None):
    B, N, F, T = x.shape
    FT = F * T
    # Pad nodes to a lane-dense multiple of 128 (256 may be preferred on v6e/v7x MXU).
    Np = _round_up(N, 128)
    isz = jnp.dtype(mxu_dtype).itemsize

    n_cores = _num_tensorcores() if num_cores is None else max(1, int(num_cores))

    # --- VMEM-aware batch-block selection -------------------------------------------
    vmem_cap = _vmem_capacity_bytes()
    budget = int(vmem_cap * 0.6)                  # headroom for compiler temporaries
    per_batch = (2 * Np * FT * isz                # x slab block (double buffered)
                 + 2 * Np * Np * 4                # out block (double buffered, f32)
                 + Np * 2 * T * (4 + isz)         # lhs/rhs f32 + low-precision copies
                 + Np * Np * (5 * 4 + isz))       # prod/sig/s/e/probs + low-prec sig
    fixed = 2 * (2 * FT * T * isz + Np * Np * 4 + Np * Np * isz)   # w12, w3e, bst, vst
    if batch_block is None:
        bb_fit = max(1, (budget - fixed) // per_batch)
    else:
        bb_fit = int(batch_block)
    bb_fit = max(1, min(bb_fit, B))

    if n_cores > 1 and B > 1:
        # Megacore (v7x): step count >= and divisible by the core count -> balanced TCs.
        num_steps = max(n_cores, pl.cdiv(B, bb_fit))
        num_steps = pl.cdiv(num_steps, n_cores) * n_cores
        Bb = pl.cdiv(B, num_steps)
    else:
        # Single TensorCore (v5e/v6e): biggest block that fits -> fewest grid steps.
        Bb = bb_fit
        num_steps = pl.cdiv(B, Bb)
    Bp = num_steps * Bb

    # --- Host-side layout plumbing (one-time / cheap XLA ops) ------------------------
    xp = x
    if Bp != B or Np != N:
        xp = jnp.pad(x, ((0, Bp - B), (0, Np - N), (0, 0), (0, 0)))
    x2d = xp.reshape(Bp * Np, FT).astype(mxu_dtype)     # lane-dense slab, rows=(b, node)

    w12, w3e = _fused_projection_weights(w1, w2, w3)    # f32
    w12 = w12.astype(mxu_dtype)
    w3e = w3e.astype(mxu_dtype)

    bst = jnp.transpose(b_s[0].astype(jnp.float32))     # bst[j, i] = b_s[0, i, j]
    vst = jnp.transpose(v_s.astype(jnp.float32))        # vst[i, a] = V_s[a, i]
    if Np != N:
        bst = jnp.pad(bst, ((0, Np - N), (0, Np - N)))
        vst = jnp.pad(vst, ((0, Np - N), (0, Np - N)))
    vst = vst.astype(mxu_dtype)

    kernel = partial(_spatial_attention_kernel, Bb=Bb, Np=Np, N=N, T=T)

    out2d = pl.pallas_call(
        kernel,
        out_shape=jax.ShapeDtypeStruct((Bp * Np, Np), jnp.float32),
        grid_spec=pltpu.PrefetchScalarGridSpec(
            num_scalar_prefetch=0,
            grid=(num_steps,),
            in_specs=[
                pl.BlockSpec((Bb * Np, FT), lambda g: (g, 0)),   # x slab (per batch block)
                pl.BlockSpec((FT, T), lambda g: (0, 0)),          # W12
                pl.BlockSpec((FT, T), lambda g: (0, 0)),          # W3e
                pl.BlockSpec((Np, Np), lambda g: (0, 0)),          # b_s^T (f32)
                pl.BlockSpec((Np, Np), lambda g: (0, 0)),          # V_s^T
            ],
            out_specs=pl.BlockSpec((Bb * Np, Np), lambda g: (g, 0)),
        ),
        compiler_params=pltpu.CompilerParams(
            dimension_semantics=("parallel",),
            vmem_limit_bytes=int(vmem_cap * 0.8),
        ),
    )(x2d, w12, w3e, bst, vst)

    # Kernel already stores the module's (b, a, j) orientation; only un-pad here.
    # (Keep N a multiple of 128 in production, or consume the padded slab, to avoid
    #  this slice entirely.)
    out = out2d.reshape(Bp, Np, Np)
    if Bp != B or Np != N:
        out = out[:B, :N, :N]
    return out


# --------------------------------------------------------------------------------------
# References (pure JAX/XLA, for correctness checks)
# --------------------------------------------------------------------------------------
def spatial_attention_reference(x, w1, w2, w3, b_s, v_s):
    """Exact f32 reference of the original module formulation."""
    lhs = jnp.einsum('bnft,t->bnf', x, w1)
    lhs = jnp.einsum('bnf,ft->bnt', lhs, w2)
    rhs = jnp.einsum('f,bnft->btn', w3, x)
    product = jnp.einsum('bnt,btm->bnm', lhs, rhs)
    sig = jax.nn.sigmoid(product + b_s)
    S = jnp.einsum('ik,bkj->bij', v_s, sig)
    S = S - jnp.max(S, axis=1, keepdims=True)
    e = jnp.exp(S)
    return e / jnp.sum(e, axis=1, keepdims=True)


def spatial_attention_matched_reference(x, w1, w2, w3, b_s, v_s, mxu_dtype=jnp.float32):
    """Reference that applies the SAME low-precision casts at the SAME matmul operands
    as the kernel (fused weights, bf16 inputs, f32 accumulation, f32 transcendentals)."""
    B, N, F, T = x.shape
    w12, w3e = _fused_projection_weights(w1, w2, w3)
    x2 = x.reshape(B, N, F * T).astype(mxu_dtype)
    lhs = jnp.einsum('bnk,kt->bnt', x2, w12.astype(mxu_dtype),
                     preferred_element_type=jnp.float32)
    rhs = jnp.einsum('bnk,kt->bnt', x2, w3e.astype(mxu_dtype),
                     preferred_element_type=jnp.float32)
    prod = jnp.einsum('bit,bjt->bij', lhs.astype(mxu_dtype), rhs.astype(mxu_dtype),
                      preferred_element_type=jnp.float32)
    sig = jax.nn.sigmoid(prod + b_s.astype(jnp.float32))
    S = jnp.einsum('ai,bij->baj', v_s.astype(mxu_dtype), sig.astype(mxu_dtype),
                   preferred_element_type=jnp.float32)
    S = S - jnp.max(S, axis=1, keepdims=True)
    e = jnp.exp(S)
    return e / jnp.sum(e, axis=1, keepdims=True)


# --------------------------------------------------------------------------------------
# Demo / self-test
# --------------------------------------------------------------------------------------
if __name__ == "__main__":
    nodes, feats, frames = 16, 4, 8

    key = jax.random.PRNGKey(0)
    kx, k1, k2, k3, kb, kv = jax.random.split(key, 6)

    W_1 = jax.random.normal(k1, (frames,), dtype=jnp.float32)
    W_2 = jax.random.normal(k2, (feats, frames), dtype=jnp.float32)
    W_3 = jax.random.normal(k3, (feats,), dtype=jnp.float32)
    b_s = jax.random.normal(kb, (1, nodes, nodes), dtype=jnp.float32)
    V_s = jax.random.normal(kv, (nodes, nodes), dtype=jnp.float32)

    # B=2 and B=5 exercise both even-step and batch-padding paths.
    for B in (2, 5):
        x = jax.random.normal(jax.random.fold_in(kx, B),
                              (B, nodes, feats, frames), dtype=jnp.float32)

        # f32-MXU path: algorithmic correctness vs. the exact original formulation
        # (tolerance dominated by the approx EUP reciprocal in the softmax).
        out_f32 = jax.block_until_ready(
            spatial_attention(x, W_1, W_2, W_3, b_s, V_s, mxu_dtype=jnp.float32))
        ref = spatial_attention_reference(x, W_1, W_2, W_3, b_s, V_s)
        assert out_f32.shape == (B, nodes, nodes)
        assert jnp.allclose(out_f32, ref, atol=2e-3, rtol=2e-3), f"f32 mismatch (B={B})"

        # Default bf16-MXU / f32-accumulate path: matches a precision-matched reference.
        out_bf16 = jax.block_until_ready(
            spatial_attention(x, W_1, W_2, W_3, b_s, V_s))
        ref_bf16 = spatial_attention_matched_reference(
            x, W_1, W_2, W_3, b_s, V_s, mxu_dtype=jnp.bfloat16)
        assert out_bf16.shape == (B, nodes, nodes)
        assert jnp.allclose(out_bf16, ref_bf16, atol=2e-3, rtol=2e-3), \
            f"bf16 mismatch (B={B})"

    print("KERNEL_OK")
</pallas_src>

<mosaic_0001>
module attributes {stable_mosaic.version = 11 : i64} {
  func.func @_spatial_attention_kernel(%arg0: i32, %arg1: memref<256x32xf32, #tpu.memory_space<vmem>>, %arg2: memref<32x8xf32, #tpu.memory_space<vmem>>, %arg3: memref<32x8xf32, #tpu.memory_space<vmem>>, %arg4: memref<128x128xf32, #tpu.memory_space<vmem>>, %arg5: memref<128x128xf32, #tpu.memory_space<vmem>>, %arg6: memref<256x128xf32, #tpu.memory_space<vmem>>) attributes {dimension_semantics = [#tpu.dimension_semantics<parallel>], iteration_bounds = array<i64: 1>, scalar_prefetch = 0 : i64, scratch_operands = 0 : i64, tpu.core_type = #tpu.core_type<tc>, window_params = [{transform_indices = @transform_0, window_bounds = array<i64: 256, 32>}, {pipeline_mode = #tpu.pipeline_mode<synchronous>, transform_indices = @transform_1, window_bounds = array<i64: 32, 8>}, {pipeline_mode = #tpu.pipeline_mode<synchronous>, transform_indices = @transform_2, window_bounds = array<i64: 32, 8>}, {pipeline_mode = #tpu.pipeline_mode<synchronous>, transform_indices = @transform_3, window_bounds = array<i64: 128, 128>}, {pipeline_mode = #tpu.pipeline_mode<synchronous>, transform_indices = @transform_4, window_bounds = array<i64: 128, 128>}, {transform_indices = @transform_5, window_bounds = array<i64: 256, 128>}]} {
    %c0 = arith.constant 0 : index
    %c0_0 = arith.constant 0 : index
    %0 = vector.load %arg1[%c0, %c0_0] : memref<256x32xf32, #tpu.memory_space<vmem>>, vector<256x32xf32>
    %c0_1 = arith.constant 0 : index
    %c0_2 = arith.constant 0 : index
    %1 = vector.load %arg2[%c0_1, %c0_2] : memref<32x8xf32, #tpu.memory_space<vmem>>, vector<32x8xf32>
    %cst = arith.constant dense<0.000000e+00> : vector<256x8xf32>
    %2 = tpu.matmul %0, %1, %cst {dimension_numbers = #tpu.dot_dimension_numbers<[1], [0], [0], [1], [0, 0, 1, 1], [], []>} : vector<256x32xf32>, vector<32x8xf32>, vector<256x8xf32> -> vector<256x8xf32>
    %c0_3 = arith.constant 0 : index
    %c0_4 = arith.constant 0 : index
    %3 = vector.load %arg3[%c0_3, %c0_4] : memref<32x8xf32, #tpu.memory_space<vmem>>, vector<32x8xf32>
    %cst_5 = arith.constant dense<0.000000e+00> : vector<256x8xf32>
    %4 = tpu.matmul %0, %3, %cst_5 {dimension_numbers = #tpu.dot_dimension_numbers<[1], [0], [0], [1], [0, 0, 1, 1], [], []>} : vector<256x32xf32>, vector<32x8xf32>, vector<256x8xf32> -> vector<256x8xf32>
    %5 = vector.shape_cast %2 : vector<256x8xf32> to vector<2x128x8xf32>
    %6 = vector.shape_cast %4 : vector<256x8xf32> to vector<2x128x8xf32>
    "tpu.trace_start"() <{level = 10 : i32, message = "bjt,bit->bji"}> : () -> ()
    %cst_6 = arith.constant dense<0.000000e+00> : vector<2x128x128xf32>
    %7 = tpu.matmul %6, %5, %cst_6 {dimension_numbers = #tpu.dot_dimension_numbers<[2], [2], [1], [1], [0, 0, 0, 1, 1, 1], [0], [0]>} : vector<2x128x8xf32>, vector<2x128x8xf32>, vector<2x128x128xf32> -> vector<2x128x128xf32>
    "tpu.trace_stop"() : () -> ()
    %c0_7 = arith.constant 0 : index
    %c0_8 = arith.constant 0 : index
    %8 = vector.load %arg4[%c0_7, %c0_8] : memref<128x128xf32, #tpu.memory_space<vmem>>, vector<128x128xf32>
    %9 = vector.shape_cast %8 : vector<128x128xf32> to vector<1x128x128xf32>
    %10 = vector.broadcast %9 : vector<1x128x128xf32> to vector<2x128x128xf32>
    %11 = arith.addf %7, %10 : vector<2x128x128xf32>
    %12 = arith.negf %11 : vector<2x128x128xf32>
    %13 = math.exp %12 : vector<2x128x128xf32>
    %cst_9 = arith.constant 1.000000e+00 : f32
    %14 = vector.broadcast %cst_9 : f32 to vector<2x128x128xf32>
    %15 = arith.addf %14, %13 : vector<2x128x128xf32>
    %16 = arith.divf %14, %15 : vector<2x128x128xf32>
    %17 = vector.shape_cast %16 : vector<2x128x128xf32> to vector<256x128xf32>
    %c0_10 = arith.constant 0 : index
    %c0_11 = arith.constant 0 : index
    %18 = vector.load %arg5[%c0_10, %c0_11] : memref<128x128xf32, #tpu.memory_space<vmem>>, vector<128x128xf32>
    %cst_12 = arith.constant dense<0.000000e+00> : vector<256x128xf32>
    %19 = tpu.matmul %17, %18, %cst_12 {dimension_numbers = #tpu.dot_dimension_numbers<[1], [0], [0], [1], [0, 0, 1, 1], [], []>} : vector<256x128xf32>, vector<128x128xf32>, vector<256x128xf32> -> vector<256x128xf32>
    %20 = tpu.iota {dimensions = array<i32: 1>} : vector<1x128xi32>
    %c16_i32 = arith.constant 16 : i32
    %21 = vector.broadcast %c16_i32 : i32 to vector<1x128xi32>
    %22 = arith.cmpi slt, %20, %21 : vector<1x128xi32>
    %cst_13 = arith.constant -1.000000e+30 : f32
    %23 = vector.shape_cast %22 : vector<1x128xi1> to vector<1x128xi1>
    %24 = vector.broadcast %23 : vector<1x128xi1> to vector<256x128xi1>
    %25 = vector.broadcast %cst_13 : f32 to vector<256x128xf32>
    %26 = arith.select %24, %19, %25 : vector<256x128xi1>, vector<256x128xf32>
    %cst_14 = arith.constant dense<0xFF800000> : vector<256xf32>
    %27 = vector.multi_reduction <maximumf>, %26, %cst_14 [1] : vector<256x128xf32> to vector<256xf32>
    %28 = vector.shape_cast %27 : vector<256xf32> to vector<256x1xf32>
    %29 = vector.broadcast %28 : vector<256x1xf32> to vector<256x128xf32>
    %30 = arith.subf %26, %29 : vector<256x128xf32>
    %31 = math.exp %30 : vector<256x128xf32>
    %cst_15 = arith.constant dense<0.000000e+00> : vector<256xf32>
    %32 = vector.multi_reduction <add>, %31, %cst_15 [1] : vector<256x128xf32> to vector<256xf32>
    %33 = vector.shape_cast %32 : vector<256xf32> to vector<256x1xf32>
    %34 = tpu.reciprocal %33 {approx = true} : vector<256x1xf32> -> vector<256x1xf32>
    %35 = vector.broadcast %34 : vector<256x1xf32> to vector<256x128xf32>
    %36 = arith.mulf %31, %35 : vector<256x128xf32>
    %37 = vector.extract_strided_slice %36 {offsets = [0, 0], sizes = [128, 128], strides = [1, 1]} : vector<256x128xf32> to vector<128x128xf32>
    %38 = tpu.transpose %37, [1, 0] : vector<128x128xf32> -> vector<128x128xf32>
    %c0_16 = arith.constant 0 : index
    %c0_17 = arith.constant 0 : index
    %39 = vector.load %arg6[%c0_16, %c0_17] : memref<256x128xf32, #tpu.memory_space<vmem>>, vector<128x128xf32>
    tpu.vector_store %arg6[%c0_16, %c0_17], %38 {strides = array<i32>} : memref<256x128xf32, #tpu.memory_space<vmem>>, vector<128x128xf32>,
    %40 = vector.extract_strided_slice %36 {offsets = [128, 0], sizes = [128, 128], strides = [1, 1]} : vector<256x128xf32> to vector<128x128xf32>
    %41 = tpu.transpose %40, [1, 0] : vector<128x128xf32> -> vector<128x128xf32>
    %c128 = arith.constant 128 : index
    %c0_18 = arith.constant 0 : index
    %42 = vector.load %arg6[%c128, %c0_18] : memref<256x128xf32, #tpu.memory_space<vmem>>, vector<128x128xf32>
    tpu.vector_store %arg6[%c128, %c0_18], %41 {strides = array<i32>} : memref<256x128xf32, #tpu.memory_space<vmem>>, vector<128x128xf32>,
    return
  }
  func.func @transform_0(%arg0: i32) -> (i32, i32) {
    %c0_i32 = arith.constant 0 : i32
    %c0_i32_0 = arith.constant 0 : i32
    return %arg0, %c0_i32 : i32, i32
  }
  func.func @transform_1(%arg0: i32) -> (i32, i32) {
    %c0_i32 = arith.constant 0 : i32
    %c0_i32_0 = arith.constant 0 : i32
    %c0_i32_1 = arith.constant 0 : i32
    return %c0_i32, %c0_i32_0 : i32, i32
  }
  func.func @transform_2(%arg0: i32) -> (i32, i32) {
    %c0_i32 = arith.constant 0 : i32
    %c0_i32_0 = arith.constant 0 : i32
    %c0_i32_1 = arith.constant 0 : i32
    return %c0_i32, %c0_i32_0 : i32, i32
  }
  func.func @transform_3(%arg0: i32) -> (i32, i32) {
    %c0_i32 = arith.constant 0 : i32
    %c0_i32_0 = arith.constant 0 : i32
    %c0_i32_1 = arith.constant 0 : i32
    return %c0_i32, %c0_i32_0 : i32, i32
  }
  func.func @transform_4(%arg0: i32) -> (i32, i32) {
    %c0_i32 = arith.constant 0 : i32
    %c0_i32_0 = arith.constant 0 : i32
    %c0_i32_1 = arith.constant 0 : i32
    return %c0_i32, %c0_i32_0 : i32, i32
  }
  func.func @transform_5(%arg0: i32) -> (i32, i32) {
    %c0_i32 = arith.constant 0 : i32
    %c0_i32_0 = arith.constant 0 : i32
    return %arg0, %c0_i32 : i32, i32
  }
}

</mosaic_0001>

<llo_original>
// kernel: tpu_custom_call.1
$region0: #{tpu_custom_call.1}
  #allocation0 [shape = 'u32[]', space=smem, size = 0x4, offset = 0x4, fixed_abs, tag = 'smem constant byte address 0x4 - core index']
  #allocation1 [shape = 'u32[144,128]{1,0:T(1,128)}', space=vmem, size = 0x12000, scoped, tag = 'internal scratch']
  %s0 = inlined_call_operand.vmem [shape: f32[256,32], index: 0, kind: input, shape index: {}]
  %s1 = inlined_call_operand.vmem [shape: f32[32,8], index: 1, kind: input, shape index: {}]
  %s2 = inlined_call_operand.vmem [shape: f32[32,8], index: 2, kind: input, shape index: {}]
  %s3 = inlined_call_operand.vmem [shape: f32[128,128], index: 3, kind: input, shape index: {}]
  %s4 = inlined_call_operand.vmem [shape: f32[128,128], index: 4, kind: input, shape index: {}]
  %s5 = inlined_call_operand.hbm [shape: f32[256,128], index: 5, kind: output, shape index: {}]
  %s6 = sld [smem:[#allocation0]]
  $region30: #{tpu_custom_call.1} parent=0
    _
  %s8 = ssub.s32 1, %s6
  %s9 = scalar_select 0, %s8, %s6
  $region1: #{tpu_custom_call.1} parent=0
    #allocation2 [shape = 'u8[131072]{0}', space=vmem, size = 0x20000, scoped, tag = 'output window, operand 0, single buffered']
    #allocation3 [shape = 's32[1]{0}', space=sflag, size = 0x4, scoped, tag = 'scoped memory for tpu_custom_call.1']
    %10 = vsyncpa [#allocation3], 0
    // Predicated region
    $region2: #{tpu_custom_call.1} parent=1 // pred_check
      _
    $region3: #{tpu_custom_call.1} parent=1 // pred_check_branch
      %12 = sbr.rel (0) target = $region5
    $region4: #{tpu_custom_call.1} parent=1 // pred_region
      _
    $region5: #{tpu_custom_call.1} parent=1 // pred_fallthru
      _
    // Predicated region
    $region6: #{tpu_custom_call.1} parent=1 // pred_check
      _
    $region7: #{tpu_custom_call.1} parent=1 // pred_check_branch
      %14 = sbr.rel (0) target = $region9
    $region8: #{tpu_custom_call.1} parent=1 // pred_region
      _
    $region9: #{tpu_custom_call.1} parent=1 // pred_fallthru
      _
    // Predicated region
    $region10: #{tpu_custom_call.1} parent=1 // pred_check
      _
    $region11: #{tpu_custom_call.1} parent=1 // pred_check_branch
      %16 = sbr.rel (0) target = $region13
    $region12: #{tpu_custom_call.1} parent=1 // pred_region
      _
    $region13: #{tpu_custom_call.1} parent=1 // pred_fallthru
      _
    // Predicated region
    $region14: #{tpu_custom_call.1} parent=1 // pred_check
      _
    $region15: #{tpu_custom_call.1} parent=1 // pred_check_branch
      %18 = sbr.rel (0) target = $region17
    $region16: #{tpu_custom_call.1} parent=1 // pred_region
      _
    $region17: #{tpu_custom_call.1} parent=1 // pred_fallthru
      _
    // Predicated region
    $region18: #{tpu_custom_call.1} parent=1 // pred_check
      _
    $region19: #{tpu_custom_call.1} parent=1 // pred_check_branch
      %20 = sbr.rel (0) target = $region21
    $region20: #{tpu_custom_call.1} parent=1 // pred_region
      _
    $region21: #{tpu_custom_call.1} parent=1 // pred_fallthru
      _
    %v21 = vld [vmem:[%s0] sm:$0xff]
    %v22 = vld [vmem:[%s0 + $0x8] sm:$0xff]
    %v23 = vld [vmem:[%s0 + $0x10] sm:$0xff]
    %v24 = vld [vmem:[%s0 + $0x18] sm:$0xff]
    %v25 = vld [vmem:[%s0 + $0x20] sm:$0xff]
    %v26 = vld [vmem:[%s0 + $0x28] sm:$0xff]
    %v27 = vld [vmem:[%s0 + $0x30] sm:$0xff]
    %v28 = vld [vmem:[%s0 + $0x38] sm:$0xff]
    %v29 = vld [vmem:[%s0 + $0x40] sm:$0xff]
    %v30 = vld [vmem:[%s0 + $0x48] sm:$0xff]
    %v31 = vld [vmem:[%s0 + $0x50] sm:$0xff]
    %v32 = vld [vmem:[%s0 + $0x58] sm:$0xff]
    %v33 = vld [vmem:[%s0 + $0x60] sm:$0xff]
    %v34 = vld [vmem:[%s0 + $0x68] sm:$0xff]
    %v35 = vld [vmem:[%s0 + $0x70] sm:$0xff]
    %v36 = vld [vmem:[%s0 + $0x78] sm:$0xff]
    %v37 = vld [vmem:[%s0 + $0x80] sm:$0xff]
    %v38 = vld [vmem:[%s0 + $0x88] sm:$0xff]
    %v39 = vld [vmem:[%s0 + $0x90] sm:$0xff]
    %v40 = vld [vmem:[%s0 + $0x98] sm:$0xff]
    %v41 = vld [vmem:[%s0 + $0xa0] sm:$0xff]
    %v42 = vld [vmem:[%s0 + $0xa8] sm:$0xff]
    %v43 = vld [vmem:[%s0 + $0xb0] sm:$0xff]
    %v44 = vld [vmem:[%s0 + $0xb8] sm:$0xff]
    %v45 = vld [vmem:[%s0 + $0xc0] sm:$0xff]
    %v46 = vld [vmem:[%s0 + $0xc8] sm:$0xff]
    %v47 = vld [vmem:[%s0 + $0xd0] sm:$0xff]
    %v48 = vld [vmem:[%s0 + $0xd8] sm:$0xff]
    %v49 = vld [vmem:[%s0 + $0xe0] sm:$0xff]
    %v50 = vld [vmem:[%s0 + $0xe8] sm:$0xff]
    %v51 = vld [vmem:[%s0 + $0xf0] sm:$0xff]
    %v52 = vld [vmem:[%s0 + $0xf8] sm:$0xff]
    %v53 = vld [vmem:[%s1] sm:$0xff]
    %v54 = vld [vmem:[%s1 + $0x8] sm:$0xff]
    %v55 = vld [vmem:[%s1 + $0x10] sm:$0xff]
    %v56 = vld [vmem:[%s1 + $0x18] sm:$0xff]
    %vm57 = vcmask 261120
    %v59 = vsel %vm57, %v21, 0
    %v62 = vsel %vm57, %v22, 0
    %v65 = vsel %vm57, %v23, 0
    %v68 = vsel %vm57, %v24, 0
    %v71 = vsel %vm57, %v25, 0
    %v74 = vsel %vm57, %v26, 0
    %v77 = vsel %vm57, %v27, 0
    %v80 = vsel %vm57, %v28, 0
    %v83 = vsel %vm57, %v29, 0
    %v86 = vsel %vm57, %v30, 0
    %v89 = vsel %vm57, %v31, 0
    %v92 = vsel %vm57, %v32, 0
    %v95 = vsel %vm57, %v33, 0
    %v98 = vsel %vm57, %v34, 0
    %v101 = vsel %vm57, %v35, 0
    %v104 = vsel %vm57, %v36, 0
    %v107 = vsel %vm57, %v37, 0
    %v110 = vsel %vm57, %v38, 0
    %v113 = vsel %vm57, %v39, 0
    %v116 = vsel %vm57, %v40, 0
    %v119 = vsel %vm57, %v41, 0
    %v122 = vsel %vm57, %v42, 0
    %v125 = vsel %vm57, %v43, 0
    %v128 = vsel %vm57, %v44, 0
    %v131 = vsel %vm57, %v45, 0
    %v134 = vsel %vm57, %v46, 0
    %v137 = vsel %vm57, %v47, 0
    %v140 = vsel %vm57, %v48, 0
    %v143 = vsel %vm57, %v49, 0
    %v146 = vsel %vm57, %v50, 0
    %v149 = vsel %vm57, %v51, 0
    %v152 = vsel %vm57, %v52, 0
    %154 = vmatprep.subr.mxu0 0.0
    %155 = vmatpush1.msra.mxu0 %v53
    %156 = vmatprep.subr.mxu0 0.0
    %157 = vmatpush1.msra.mxu0 %v54
    %158 = vmatprep.subr.mxu0 0.0
    %159 = vmatpush1.msra.mxu0 %v55
    %160 = vmatprep.subr.mxu0 0.0
    %161 = vmatpush1.msra.mxu0 %v56
    %162 = vmatprep.subr.mxu0 0.0
    %163 = vmatpush1.msra.mxu0 0.0
    %164 = vmatprep.subr.mxu0 0.0
    %165 = vmatpush1.msra.mxu0 0.0
    %166 = vmatprep.subr.mxu0 0.0
    %167 = vmatpush1.msra.mxu0 0.0
    %168 = vmatprep.subr.mxu0 0.0
    %169 = vmatpush1.msra.mxu0 0.0
    %170 = vmatprep.subr.mxu0 0.0
    %171 = vmatpush1.msra.mxu0 0.0
    %172 = vmatprep.subr.mxu0 0.0
    %173 = vmatpush1.msra.mxu0 0.0
    %174 = vmatprep.subr.mxu0 0.0
    %175 = vmatpush1.msra.mxu0 0.0
    %176 = vmatprep.subr.mxu0 0.0
    %177 = vmatpush1.msra.mxu0 0.0
    %178 = vmatprep.subr.mxu0 0.0
    %179 = vmatpush1.msra.mxu0 0.0
    %180 = vmatprep.subr.mxu0 0.0
    %181 = vmatpush1.msra.mxu0 0.0
    %182 = vmatprep.subr.mxu0 0.0
    %183 = vmatpush1.msra.mxu0 0.0
    %184 = vmatprep.subr.mxu0 0.0
    %185 = vmatpush1.msra.mxu0 0.0
    %186 = vmatprep.subr.mxu0 0.0
    %187 = vmatpush1.msra.mxu0 0.0
    %188 = vmatprep.subr.mxu0 0.0
    %189 = vmatpush1.msra.mxu0 0.0
    %190 = vmatprep.subr.mxu0 0.0
    %191 = vmatpush1.msra.mxu0 0.0
    %192 = vmatprep.subr.mxu0 0.0
    %193 = vmatpush1.msra.mxu0 0.0
    %194 = vmatprep.subr.mxu0 0.0
    %195 = vmatpush1.msra.mxu0 0.0
    %196 = vmatprep.subr.mxu0 0.0
    %197 = vmatpush1.msra.mxu0 0.0
    %198 = vmatprep.subr.mxu0 0.0
    %199 = vmatpush1.msra.mxu0 0.0
    %200 = vmatprep.subr.mxu0 0.0
    %201 = vmatpush1.msra.mxu0 0.0
    %202 = vmatprep.subr.mxu0 0.0
    %203 = vmatpush1.msra.mxu0 0.0
    %204 = vmatprep.subr.mxu0 0.0
    %205 = vmatpush1.msra.mxu0 0.0
    %206 = vmatprep.subr.mxu0 0.0
    %207 = vmatpush1.msra.mxu0 0.0
    %208 = vmatprep.subr.mxu0 0.0
    %209 = vmatpush1.msra.mxu0 0.0
    %210 = vmatprep.subr.mxu0 0.0
    %211 = vmatpush1.msra.mxu0 0.0
    %212 = vmatprep.subr.mxu0 0.0
    %213 = vmatpush1.msra.mxu0 0.0
    %214 = vmatprep.subr.mxu0 0.0
    %215 = vmatpush1.msra.mxu0 0.0
    %216 = vmatprep.subr.mxu0 0.0
    %217 = vmatpush1.msra.mxu0 0.0
    %218 = vmatprep.mubr.f32.mxu0 0.0
    %219 = vmatmul.mubr.f32.gmra.mrb[0].mxu0 %v59
    %v220 = vpop.f32.mrb[0].mxu0
    %v221 = vadd.f32 0.0, %v220
    %v222 = vpop.f32.mrb[0].mxu0
    %223 = vmatprep.mubr.f32.mxu0 0.0
    %224 = vmatmul.mubr.f32.gmra.mrb[0].mxu0 %v62
    %v225 = vpop.f32.mrb[0].mxu0
    %v226 = vadd.f32 0.0, %v225
    %v227 = vpop.f32.mrb[0].mxu0
    %228 = vmatprep.mubr.f32.mxu0 0.0
    %229 = vmatmul.mubr.f32.gmra.mrb[0].mxu0 %v65
    %v230 = vpop.f32.mrb[0].mxu0
    %v231 = vadd.f32 0.0, %v230
    %v232 = vpop.f32.mrb[0].mxu0
    %233 = vmatprep.mubr.f32.mxu0 0.0
    %234 = vmatmul.mubr.f32.gmra.mrb[0].mxu0 %v68
    %v235 = vpop.f32.mrb[0].mxu0
    %v236 = vadd.f32 0.0, %v235
    %v237 = vpop.f32.mrb[0].mxu0
    %238 = vmatprep.mubr.f32.mxu0 0.0
    %239 = vmatmul.mubr.f32.gmra.mrb[0].mxu0 %v71
    %v240 = vpop.f32.mrb[0].mxu0
    %v241 = vadd.f32 0.0, %v240
    %v242 = vpop.f32.mrb[0].mxu0
    %243 = vmatprep.mubr.f32.mxu0 0.0
    %244 = vmatmul.mubr.f32.gmra.mrb[0].mxu0 %v74
    %v245 = vpop.f32.mrb[0].mxu0
    %v246 = vadd.f32 0.0, %v245
    %v247 = vpop.f32.mrb[0].mxu0
    %248 = vmatprep.mubr.f32.mxu0 0.0
    %249 = vmatmul.mubr.f32.gmra.mrb[0].mxu0 %v77
    %v250 = vpop.f32.mrb[0].mxu0
    %v251 = vadd.f32 0.0, %v250
    %v252 = vpop.f32.mrb[0].mxu0
    %253 = vmatprep.mubr.f32.mxu0 0.0
    %254 = vmatmul.mubr.f32.gmra.mrb[0].mxu0 %v80
    %v255 = vpop.f32.mrb[0].mxu0
    %v256 = vadd.f32 0.0, %v255
    %v257 = vpop.f32.mrb[0].mxu0
    %258 = vmatprep.mubr.f32.mxu0 0.0
    %259 = vmatmul.mubr.f32.gmra.mrb[0].mxu0 %v83
    %v260 = vpop.f32.mrb[0].mxu0
    %v261 = vadd.f32 0.0, %v260
    %v262 = vpop.f32.mrb[0].mxu0
    %263 = vmatprep.mubr.f32.mxu0 0.0
    %264 = vmatmul.mubr.f32.gmra.mrb[0].mxu0 %v86
    %v265 = vpop.f32.mrb[0].mxu0
    %v266 = vadd.f32 0.0, %v265
    %v267 = vpop.f32.mrb[0].mxu0
    %268 = vmatprep.mubr.f32.mxu0 0.0
    %269 = vmatmul.mubr.f32.gmra.mrb[0].mxu0 %v89
    %v270 = vpop.f32.mrb[0].mxu0
    %v271 = vadd.f32 0.0, %v270
    %v272 = vpop.f32.mrb[0].mxu0
    %273 = vmatprep.mubr.f32.mxu0 0.0
    %274 = vmatmul.mubr.f32.gmra.mrb[0].mxu0 %v92
    %v275 = vpop.f32.mrb[0].mxu0
    %v276 = vadd.f32 0.0, %v275
    %v277 = vpop.f32.mrb[0].mxu0
    %278 = vmatprep.mubr.f32.mxu0 0.0
    %279 = vmatmul.mubr.f32.gmra.mrb[0].mxu0 %v95
    %v280 = vpop.f32.mrb[0].mxu0
    %v281 = vadd.f32 0.0, %v280
    %v282 = vpop.f32.mrb[0].mxu0
    %283 = vmatprep.mubr.f32.mxu0 0.0
    %284 = vmatmul.mubr.f32.gmra.mrb[0].mxu0 %v98
    %v285 = vpop.f32.mrb[0].mxu0
    %v286 = vadd.f32 0.0, %v285
    %v287 = vpop.f32.mrb[0].mxu0
    %288 = vmatprep.mubr.f32.mxu0 0.0
    %289 = vmatmul.mubr.f32.gmra.mrb[0].mxu0 %v101
    %v290 = vpop.f32.mrb[0].mxu0
    %v291 = vadd.f32 0.0, %v290
    %v292 = vpop.f32.mrb[0].mxu0
    %293 = vmatprep.mubr.f32.mxu0 0.0
    %294 = vmatmul.mubr.f32.gmra.mrb[0].mxu0 %v104
    %v295 = vpop.f32.mrb[0].mxu0
    %v296 = vadd.f32 0.0, %v295
    %v297 = vpop.f32.mrb[0].mxu0
    %298 = vmatprep.mubr.f32.mxu0 0.0
    %299 = vmatmul.mubr.f32.gmra.mrb[0].mxu0 %v107
    %v300 = vpop.f32.mrb[0].mxu0
    %v301 = vadd.f32 0.0, %v300
    %v302 = vpop.f32.mrb[0].mxu0
    %303 = vmatprep.mubr.f32.mxu0 0.0
    %304 = vmatmul.mubr.f32.gmra.mrb[0].mxu0 %v110
    %v305 = vpop.f32.mrb[0].mxu0
    %v306 = vadd.f32 0.0, %v305
    %v307 = vpop.f32.mrb[0].mxu0
    %308 = vmatprep.mubr.f32.mxu0 0.0
    %309 = vmatmul.mubr.f32.gmra.mrb[0].mxu0 %v113
    %v310 = vpop.f32.mrb[0].mxu0
    %v311 = vadd.f32 0.0, %v310
    %v312 = vpop.f32.mrb[0].mxu0
    %313 = vmatprep.mubr.f32.mxu0 0.0
    %314 = vmatmul.mubr.f32.gmra.mrb[0].mxu0 %v116
    %v315 = vpop.f32.mrb[0].mxu0
    %v316 = vadd.f32 0.0, %v315
    %v317 = vpop.f32.mrb[0].mxu0
    %318 = vmatprep.mubr.f32.mxu0 0.0
    %319 = vmatmul.mubr.f32.gmra.mrb[0].mxu0 %v119
    %v320 = vpop.f32.mrb[0].mxu0
    %v321 = vadd.f32 0.0, %v320
    %v322 = vpop.f32.mrb[0].mxu0
    %323 = vmatprep.mubr.f32.mxu0 0.0
    %324 = vmatmul.mubr.f32.gmra.mrb[0].mxu0 %v122
    %v325 = vpop.f32.mrb[0].mxu0
    %v326 = vadd.f32 0.0, %v325
    %v327 = vpop.f32.mrb[0].mxu0
    %328 = vmatprep.mubr.f32.mxu0 0.0
    %329 = vmatmul.mubr.f32.gmra.mrb[0].mxu0 %v125
    %v330 = vpop.f32.mrb[0].mxu0
    %v331 = vadd.f32 0.0, %v330
    %v332 = vpop.f32.mrb[0].mxu0
    %333 = vmatprep.mubr.f32.mxu0 0.0
    %334 = vmatmul.mubr.f32.gmra.mrb[0].mxu0 %v128
    %v335 = vpop.f32.mrb[0].mxu0
    %v336 = vadd.f32 0.0, %v335
    %v337 = vpop.f32.mrb[0].mxu0
    %338 = vmatprep.mubr.f32.mxu0 0.0
    %339 = vmatmul.mubr.f32.gmra.mrb[0].mxu0 %v131
    %v340 = vpop.f32.mrb[0].mxu0
    %v341 = vadd.f32 0.0, %v340
    %v342 = vpop.f32.mrb[0].mxu0
    %343 = vmatprep.mubr.f32.mxu0 0.0
    %344 = vmatmul.mubr.f32.gmra.mrb[0].mxu0 %v134
    %v345 = vpop.f32.mrb[0].mxu0
    %v346 = vadd.f32 0.0, %v345
    %v347 = vpop.f32.mrb[0].mxu0
    %348 = vmatprep.mubr.f32.mxu0 0.0
    %349 = vmatmul.mubr.f32.gmra.mrb[0].mxu0 %v137
    %v350 = vpop.f32.mrb[0].mxu0
    %v351 = vadd.f32 0.0, %v350
    %v352 = vpop.f32.mrb[0].mxu0
    %353 = vmatprep.mubr.f32.mxu0 0.0
    %354 = vmatmul.mubr.f32.gmra.mrb[0].mxu0 %v140
    %v355 = vpop.f32.mrb[0].mxu0
    %v356 = vadd.f32 0.0, %v355
    %v357 = vpop.f32.mrb[0].mxu0
    %358 = vmatprep.mubr.f32.mxu0 0.0
    %359 = vmatmul.mubr.f32.gmra.mrb[0].mxu0 %v143
    %v360 = vpop.f32.mrb[0].mxu0
    %v361 = vadd.f32 0.0, %v360
    %v362 = vpop.f32.mrb[0].mxu0
    %363 = vmatprep.mubr.f32.mxu0 0.0
    %364 = vmatmul.mubr.f32.gmra.mrb[0].mxu0 %v146
    %v365 = vpop.f32.mrb[0].mxu0
    %v366 = vadd.f32 0.0, %v365
    %v367 = vpop.f32.mrb[0].mxu0
    %368 = vmatprep.mubr.f32.mxu0 0.0
    %369 = vmatmul.mubr.f32.gmra.mrb[0].mxu0 %v149
    %v370 = vpop.f32.mrb[0].mxu0
    %v371 = vadd.f32 0.0, %v370
    %v372 = vpop.f32.mrb[0].mxu0
    %373 = vmatprep.mubr.f32.mxu0 0.0
    %374 = vmatmul.mubr.f32.gmra.mrb[0].mxu0 %v152
    %v375 = vpop.f32.mrb[0].mxu0
    %v376 = vadd.f32 0.0, %v375
    %v377 = vpop.f32.mrb[0].mxu0
    %378 = vdwg.mxu0
    %v379 = vld [vmem:[%s2] sm:$0xff]
    %v380 = vld [vmem:[%s2 + $0x8] sm:$0xff]
    %v381 = vld [vmem:[%s2 + $0x10] sm:$0xff]
    %v382 = vld [vmem:[%s2 + $0x18] sm:$0xff]
    %383 = vmatprep.subr.mxu0 0.0
    %384 = vmatpush1.msra.mxu0 %v379
    %385 = vmatprep.subr.mxu0 0.0
    %386 = vmatpush1.msra.mxu0 %v380
    %387 = vmatprep.subr.mxu0 0.0
    %388 = vmatpush1.msra.mxu0 %v381
    %389 = vmatprep.subr.mxu0 0.0
    %390 = vmatpush1.msra.mxu0 %v382
    %391 = vmatprep.subr.mxu0 0.0
    %392 = vmatpush1.msra.mxu0 0.0
    %393 = vmatprep.subr.mxu0 0.0
    %394 = vmatpush1.msra.mxu0 0.0
    %395 = vmatprep.subr.mxu0 0.0
    %396 = vmatpush1.msra.mxu0 0.0
    %397 = vmatprep.subr.mxu0 0.0
    %398 = vmatpush1.msra.mxu0 0.0
    %399 = vmatprep.subr.mxu0 0.0
    %400 = vmatpush1.msra.mxu0 0.0
    %401 = vmatprep.subr.mxu0 0.0
    %402 = vmatpush1.msra.mxu0 0.0
    %403 = vmatprep.subr.mxu0 0.0
    %404 = vmatpush1.msra.mxu0 0.0
    %405 = vmatprep.subr.mxu0 0.0
    %406 = vmatpush1.msra.mxu0 0.0
    %407 = vmatprep.subr.mxu0 0.0
    %408 = vmatpush1.msra.mxu0 0.0
    %409 = vmatprep.subr.mxu0 0.0
    %410 = vmatpush1.msra.mxu0 0.0
    %411 = vmatprep.subr.mxu0 0.0
    %412 = vmatpush1.msra.mxu0 0.0
    %413 = vmatprep.subr.mxu0 0.0
    %414 = vmatpush1.msra.mxu0 0.0
    %415 = vmatprep.subr.mxu0 0.0
    %416 = vmatpush1.msra.mxu0 0.0
    %417 = vmatprep.subr.mxu0 0.0
    %418 = vmatpush1.msra.mxu0 0.0
    %419 = vmatprep.subr.mxu0 0.0
    %420 = vmatpush1.msra.mxu0 0.0
    %421 = vmatprep.subr.mxu0 0.0
    %422 = vmatpush1.msra.mxu0 0.0
    %423 = vmatprep.subr.mxu0 0.0
    %424 = vmatpush1.msra.mxu0 0.0
    %425 = vmatprep.subr.mxu0 0.0
    %426 = vmatpush1.msra.mxu0 0.0
    %427 = vmatprep.subr.mxu0 0.0
    %428 = vmatpush1.msra.mxu0 0.0
    %429 = vmatprep.subr.mxu0 0.0
    %430 = vmatpush1.msra.mxu0 0.0
    %431 = vmatprep.subr.mxu0 0.0
    %432 = vmatpush1.msra.mxu0 0.0
    %433 = vmatprep.subr.mxu0 0.0
    %434 = vmatpush1.msra.mxu0 0.0
    %435 = vmatprep.subr.mxu0 0.0
    %436 = vmatpush1.msra.mxu0 0.0
    %437 = vmatprep.subr.mxu0 0.0
    %438 = vmatpush1.msra.mxu0 0.0
    %439 = vmatprep.subr.mxu0 0.0
    %440 = vmatpush1.msra.mxu0 0.0
    %441 = vmatprep.subr.mxu0 0.0
    %442 = vmatpush1.msra.mxu0 0.0
    %443 = vmatprep.subr.mxu0 0.0
    %444 = vmatpush1.msra.mxu0 0.0
    %445 = vmatprep.subr.mxu0 0.0
    %446 = vmatpush1.msra.mxu0 0.0
    %447 = vmatprep.mubr.f32.mxu0 0.0
    %448 = vmatmul.mubr.f32.gmra.mrb[0].mxu0 %v59
    %v449 = vpop.f32.mrb[0].mxu0
    %v450 = vadd.f32 0.0, %v449
    %v451 = vpop.f32.mrb[0].mxu0
    %452 = vmatprep.mubr.f32.mxu0 0.0
    %453 = vmatmul.mubr.f32.gmra.mrb[0].mxu0 %v62
    %v454 = vpop.f32.mrb[0].mxu0
    %v455 = vadd.f32 0.0, %v454
    %v456 = vpop.f32.mrb[0].mxu0
    %457 = vmatprep.mubr.f32.mxu0 0.0
    %458 = vmatmul.mubr.f32.gmra.mrb[0].mxu0 %v65
    %v459 = vpop.f32.mrb[0].mxu0
    %v460 = vadd.f32 0.0, %v459
    %v461 = vpop.f32.mrb[0].mxu0
    %462 = vmatprep.mubr.f32.mxu0 0.0
    %463 = vmatmul.mubr.f32.gmra.mrb[0].mxu0 %v68
    %v464 = vpop.f32.mrb[0].mxu0
    %v465 = vadd.f32 0.0, %v464
    %v466 = vpop.f32.mrb[0].mxu0
    %467 = vmatprep.mubr.f32.mxu0 0.0
    %468 = vmatmul.mubr.f32.gmra.mrb[0].mxu0 %v71
    %v469 = vpop.f32.mrb[0].mxu0
    %v470 = vadd.f32 0.0, %v469
    %v471 = vpop.f32.mrb[0].mxu0
    %472 = vmatprep.mubr.f32.mxu0 0.0
    %473 = vmatmul.mubr.f32.gmra.mrb[0].mxu0 %v74
    %v474 = vpop.f32.mrb[0].mxu0
    %v475 = vadd.f32 0.0, %v474
    %v476 = vpop.f32.mrb[0].mxu0
    %477 = vmatprep.mubr.f32.mxu0 0.0
    %478 = vmatmul.mubr.f32.gmra.mrb[0].mxu0 %v77
    %v479 = vpop.f32.mrb[0].mxu0
    %v480 = vadd.f32 0.0, %v479
    %v481 = vpop.f32.mrb[0].mxu0
    %482 = vmatprep.mubr.f32.mxu0 0.0
    %483 = vmatmul.mubr.f32.gmra.mrb[0].mxu0 %v80
    %v484 = vpop.f32.mrb[0].mxu0
    %v485 = vadd.f32 0.0, %v484
    %v486 = vpop.f32.mrb[0].mxu0
    %487 = vmatprep.mubr.f32.mxu0 0.0
    %488 = vmatmul.mubr.f32.gmra.mrb[0].mxu0 %v83
    %v489 = vpop.f32.mrb[0].mxu0
    %v490 = vadd.f32 0.0, %v489
    %v491 = vpop.f32.mrb[0].mxu0
    %492 = vmatprep.mubr.f32.mxu0 0.0
    %493 = vmatmul.mubr.f32.gmra.mrb[0].mxu0 %v86
    %v494 = vpop.f32.mrb[0].mxu0
    %v495 = vadd.f32 0.0, %v494
    %v496 = vpop.f32.mrb[0].mxu0
    %497 = vmatprep.mubr.f32.mxu0 0.0
    %498 = vmatmul.mubr.f32.gmra.mrb[0].mxu0 %v89
    %v499 = vpop.f32.mrb[0].mxu0
    %v500 = vadd.f32 0.0, %v499
    %v501 = vpop.f32.mrb[0].mxu0
    %502 = vmatprep.mubr.f32.mxu0 0.0
    %503 = vmatmul.mubr.f32.gmra.mrb[0].mxu0 %v92
    %v504 = vpop.f32.mrb[0].mxu0
    %v505 = vadd.f32 0.0, %v504
    %v506 = vpop.f32.mrb[0].mxu0
    %507 = vmatprep.mubr.f32.mxu0 0.0
    %508 = vmatmul.mubr.f32.gmra.mrb[0].mxu0 %v95
    %v509 = vpop.f32.mrb[0].mxu0
    %v510 = vadd.f32 0.0, %v509
    %v511 = vpop.f32.mrb[0].mxu0
    %512 = vmatprep.mubr.f32.mxu0 0.0
    %513 = vmatmul.mubr.f32.gmra.mrb[0].mxu0 %v98
    %v514 = vpop.f32.mrb[0].mxu0
    %v515 = vadd.f32 0.0, %v514
    %v516 = vpop.f32.mrb[0].mxu0
    %517 = vmatprep.mubr.f32.mxu0 0.0
    %518 = vmatmul.mubr.f32.gmra.mrb[0].mxu0 %v101
    %v519 = vpop.f32.mrb[0].mxu0
    %v520 = vadd.f32 0.0, %v519
    %v521 = vpop.f32.mrb[0].mxu0
    %522 = vmatprep.mubr.f32.mxu0 0.0
    %523 = vmatmul.mubr.f32.gmra.mrb[0].mxu0 %v104
    %v524 = vpop.f32.mrb[0].mxu0
    %v525 = vadd.f32 0.0, %v524
    %v526 = vpop.f32.mrb[0].mxu0
    %527 = vmatprep.mubr.f32.mxu0 0.0
    %528 = vmatmul.mubr.f32.gmra.mrb[0].mxu0 %v107
    %v529 = vpop.f32.mrb[0].mxu0
    %v530 = vadd.f32 0.0, %v529
    %v531 = vpop.f32.mrb[0].mxu0
    %532 = vmatprep.mubr.f32.mxu0 0.0
    %533 = vmatmul.mubr.f32.gmra.mrb[0].mxu0 %v110
    %v534 = vpop.f32.mrb[0].mxu0
    %v535 = vadd.f32 0.0, %v534
    %v536 = vpop.f32.mrb[0].mxu0
    %537 = vmatprep.mubr.f32.mxu0 0.0
    %538 = vmatmul.mubr.f32.gmra.mrb[0].mxu0 %v113
    %v539 = vpop.f32.mrb[0].mxu0
    %v540 = vadd.f32 0.0, %v539
    %v541 = vpop.f32.mrb[0].mxu0
    %542 = vmatprep.mubr.f32.mxu0 0.0
    %543 = vmatmul.mubr.f32.gmra.mrb[0].mxu0 %v116
    %v544 = vpop.f32.mrb[0].mxu0
    %v545 = vadd.f32 0.0, %v544
    %v546 = vpop.f32.mrb[0].mxu0
    %547 = vmatprep.mubr.f32.mxu0 0.0
    %548 = vmatmul.mubr.f32.gmra.mrb[0].mxu0 %v119
    %v549 = vpop.f32.mrb[0].mxu0
    %v550 = vadd.f32 0.0, %v549
    %v551 = vpop.f32.mrb[0].mxu0
    %552 = vmatprep.mubr.f32.mxu0 0.0
    %553 = vmatmul.mubr.f32.gmra.mrb[0].mxu0 %v122
    %v554 = vpop.f32.mrb[0].mxu0
    %v555 = vadd.f32 0.0, %v554
    %v556 = vpop.f32.mrb[0].mxu0
    %557 = vmatprep.mubr.f32.mxu0 0.0
    %558 = vmatmul.mubr.f32.gmra.mrb[0].mxu0 %v125
    %v559 = vpop.f32.mrb[0].mxu0
    %v560 = vadd.f32 0.0, %v559
    %v561 = vpop.f32.mrb[0].mxu0
    %562 = vmatprep.mubr.f32.mxu0 0.0
    %563 = vmatmul.mubr.f32.gmra.mrb[0].mxu0 %v128
    %v564 = vpop.f32.mrb[0].mxu0
    %v565 = vadd.f32 0.0, %v564
    %v566 = vpop.f32.mrb[0].mxu0
    %567 = vmatprep.mubr.f32.mxu0 0.0
    %568 = vmatmul.mubr.f32.gmra.mrb[0].mxu0 %v131
    %v569 = vpop.f32.mrb[0].mxu0
    %v570 = vadd.f32 0.0, %v569
    %v571 = vpop.f32.mrb[0].mxu0
    %572 = vmatprep.mubr.f32.mxu0 0.0
    %573 = vmatmul.mubr.f32.gmra.mrb[0].mxu0 %v134
    %v574 = vpop.f32.mrb[0].mxu0
    %v575 = vadd.f32 0.0, %v574
    %v576 = vpop.f32.mrb[0].mxu0
    %577 = vmatprep.mubr.f32.mxu0 0.0
    %578 = vmatmul.mubr.f32.gmra.mrb[0].mxu0 %v137
    %v579 = vpop.f32.mrb[0].mxu0
    %v580 = vadd.f32 0.0, %v579
    %v581 = vpop.f32.mrb[0].mxu0
    %582 = vmatprep.mubr.f32.mxu0 0.0
    %583 = vmatmul.mubr.f32.gmra.mrb[0].mxu0 %v140
    %v584 = vpop.f32.mrb[0].mxu0
    %v585 = vadd.f32 0.0, %v584
    %v586 = vpop.f32.mrb[0].mxu0
    %587 = vmatprep.mubr.f32.mxu0 0.0
    %588 = vmatmul.mubr.f32.gmra.mrb[0].mxu0 %v143
    %v589 = vpop.f32.mrb[0].mxu0
    %v590 = vadd.f32 0.0, %v589
    %v591 = vpop.f32.mrb[0].mxu0
    %592 = vmatprep.mubr.f32.mxu0 0.0
    %593 = vmatmul.mubr.f32.gmra.mrb[0].mxu0 %v146
    %v594 = vpop.f32.mrb[0].mxu0
    %v595 = vadd.f32 0.0, %v594
    %v596 = vpop.f32.mrb[0].mxu0
    %597 = vmatprep.mubr.f32.mxu0 0.0
    %598 = vmatmul.mubr.f32.gmra.mrb[0].mxu0 %v149
    %v599 = vpop.f32.mrb[0].mxu0
    %v600 = vadd.f32 0.0, %v599
    %v601 = vpop.f32.mrb[0].mxu0
    %602 = vmatprep.mubr.f32.mxu0 0.0
    %603 = vmatmul.mubr.f32.gmra.mrb[0].mxu0 %v152
    %v604 = vpop.f32.mrb[0].mxu0
    %v605 = vadd.f32 0.0, %v604
    %v606 = vpop.f32.mrb[0].mxu0
    %607 = vdwg.mxu0
    %v608 = vld [vmem:[%s3] sm:$0xff]
    %v609 = vld [vmem:[%s3 + $0x8] sm:$0xff]
    %v610 = vld [vmem:[%s3 + $0x10] sm:$0xff]
    %v611 = vld [vmem:[%s3 + $0x18] sm:$0xff]
    %v612 = vld [vmem:[%s3 + $0x20] sm:$0xff]
    %v613 = vld [vmem:[%s3 + $0x28] sm:$0xff]
    %v614 = vld [vmem:[%s3 + $0x30] sm:$0xff]
    %v615 = vld [vmem:[%s3 + $0x38] sm:$0xff]
    %v616 = vld [vmem:[%s3 + $0x40] sm:$0xff]
    %v617 = vld [vmem:[%s3 + $0x48] sm:$0xff]
    %v618 = vld [vmem:[%s3 + $0x50] sm:$0xff]
    %v619 = vld [vmem:[%s3 + $0x58] sm:$0xff]
    %v620 = vld [vmem:[%s3 + $0x60] sm:$0xff]
    %v621 = vld [vmem:[%s3 + $0x68] sm:$0xff]
    %v622 = vld [vmem:[%s3 + $0x70] sm:$0xff]
    %v623 = vld [vmem:[%s3 + $0x78] sm:$0xff]
    %vm624 = vcmask 64512
    %v626 = vsel %vm624, %v450, 0
    %v629 = vsel %vm624, %v455, 0
    %v632 = vsel %vm624, %v460, 0
    %v635 = vsel %vm624, %v465, 0
    %v638 = vsel %vm624, %v470, 0
    %v641 = vsel %vm624, %v475, 0
    %v644 = vsel %vm624, %v480, 0
    %v647 = vsel %vm624, %v485, 0
    %v650 = vsel %vm624, %v490, 0
    %v653 = vsel %vm624, %v495, 0
    %v656 = vsel %vm624, %v500, 0
    %v659 = vsel %vm624, %v505, 0
    %v662 = vsel %vm624, %v510, 0
    %v665 = vsel %vm624, %v515, 0
    %v668 = vsel %vm624, %v520, 0
    %v671 = vsel %vm624, %v525, 0
    %v674 = vsel %vm624, %v221, 0
    %v677 = vsel %vm624, %v226, 0
    %v680 = vsel %vm624, %v231, 0
    %v683 = vsel %vm624, %v236, 0
    %v686 = vsel %vm624, %v241, 0
    %v689 = vsel %vm624, %v246, 0
    %v692 = vsel %vm624, %v251, 0
    %v695 = vsel %vm624, %v256, 0
    %v698 = vsel %vm624, %v261, 0
    %v701 = vsel %vm624, %v266, 0
    %v704 = vsel %vm624, %v271, 0
    %v707 = vsel %vm624, %v276, 0
    %v710 = vsel %vm624, %v281, 0
    %v713 = vsel %vm624, %v286, 0
    %v716 = vsel %vm624, %v291, 0
    %v719 = vsel %vm624, %v296, 0
    %721 = vmatprep.subr.mxu0 0.0
    %722 = vmatpush1.xpose.msra.mxu0 %v674
    %723 = vmatprep.subr.mxu0 0.0
    %724 = vmatpush1.xpose.msra.mxu0 %v677
    %725 = vmatprep.subr.mxu0 0.0
    %726 = vmatpush1.xpose.msra.mxu0 %v680
    %727 = vmatprep.subr.mxu0 0.0
    %728 = vmatpush1.xpose.msra.mxu0 %v683
    %729 = vmatprep.subr.mxu0 0.0
    %730 = vmatpush1.xpose.msra.mxu0 %v686
    %731 = vmatprep.subr.mxu0 0.0
    %732 = vmatpush1.xpose.msra.mxu0 %v689
    %733 = vmatprep.subr.mxu0 0.0
    %734 = vmatpush1.xpose.msra.mxu0 %v692
    %735 = vmatprep.subr.mxu0 0.0
    %736 = vmatpush1.xpose.msra.mxu0 %v695
    %737 = vmatprep.subr.mxu0 0.0
    %738 = vmatpush1.xpose.msra.mxu0 %v698
    %739 = vmatprep.subr.mxu0 0.0
    %740 = vmatpush1.xpose.msra.mxu0 %v701
    %741 = vmatprep.subr.mxu0 0.0
    %742 = vmatpush1.xpose.msra.mxu0 %v704
    %743 = vmatprep.subr.mxu0 0.0
    %744 = vmatpush1.xpose.msra.mxu0 %v707
    %745 = vmatprep.subr.mxu0 0.0
    %746 = vmatpush1.xpose.msra.mxu0 %v710
    %747 = vmatprep.subr.mxu0 0.0
    %748 = vmatpush1.xpose.msra.mxu0 %v713
    %749 = vmatprep.subr.mxu0 0.0
    %750 = vmatpush1.xpose.msra.mxu0 %v716
    %751 = vmatprep.subr.mxu0 0.0
    %752 = vmatpush1.xpose.msra.mxu0 %v719
    %753 = vmatprep.subr.mxu0 0.0
    %754 = vmatpush1.xpose.msra.mxu0 0.0
    %755 = vmatprep.subr.mxu0 0.0
    %756 = vmatpush1.xpose.msra.mxu0 0.0
    %757 = vmatprep.subr.mxu0 0.0
    %758 = vmatpush1.xpose.msra.mxu0 0.0
    %759 = vmatprep.subr.mxu0 0.0
    %760 = vmatpush1.xpose.msra.mxu0 0.0
    %761 = vmatprep.subr.mxu0 0.0
    %762 = vmatpush1.xpose.msra.mxu0 0.0
    %763 = vmatprep.subr.mxu0 0.0
    %764 = vmatpush1.xpose.msra.mxu0 0.0
    %765 = vmatprep.subr.mxu0 0.0
    %766 = vmatpush1.xpose.msra.mxu0 0.0
    %767 = vmatprep.subr.mxu0 0.0
    %768 = vmatpush1.xpose.msra.mxu0 0.0
    %769 = vmatprep.subr.mxu0 0.0
    %770 = vmatpush1.xpose.msra.mxu0 0.0
    %771 = vmatprep.subr.mxu0 0.0
    %772 = vmatpush1.xpose.msra.mxu0 0.0
    %773 = vmatprep.subr.mxu0 0.0
    %774 = vmatpush1.xpose.msra.mxu0 0.0
    %775 = vmatprep.subr.mxu0 0.0
    %776 = vmatpush1.xpose.msra.mxu0 0.0
    %777 = vmatprep.subr.mxu0 0.0
    %778 = vmatpush1.xpose.msra.mxu0 0.0
    %779 = vmatprep.subr.mxu0 0.0
    %780 = vmatpush1.xpose.msra.mxu0 0.0
    %781 = vmatprep.subr.mxu0 0.0
    %782 = vmatpush1.xpose.msra.mxu0 0.0
    %783 = vmatprep.subr.mxu0 0.0
    %784 = vmatpush1.xpose.msra.mxu0 0.0
    %785 = vmatprep.mubr.f32.mxu0 0.0
    %786 = vmatmul.mubr.f32.gmra.mrb[0].mxu0 %v626
    %v787 = vpop.f32.mrb[0].mxu0
    %v788 = vadd.f32 %v608, %v787
    %v789 = vpop.f32.mrb[0].mxu0
    %790 = vmatprep.mubr.f32.mxu0 0.0
    %791 = vmatmul.mubr.f32.gmra.mrb[0].mxu0 %v629
    %v792 = vpop.f32.mrb[0].mxu0
    %v793 = vadd.f32 %v609, %v792
    %v794 = vpop.f32.mrb[0].mxu0
    %795 = vmatprep.mubr.f32.mxu0 0.0
    %796 = vmatmul.mubr.f32.gmra.mrb[0].mxu0 %v632
    %v797 = vpop.f32.mrb[0].mxu0
    %v798 = vadd.f32 %v610, %v797
    %v799 = vpop.f32.mrb[0].mxu0
    %800 = vmatprep.mubr.f32.mxu0 0.0
    %801 = vmatmul.mubr.f32.gmra.mrb[0].mxu0 %v635
    %v802 = vpop.f32.mrb[0].mxu0
    %v803 = vadd.f32 %v611, %v802
    %v804 = vpop.f32.mrb[0].mxu0
    %805 = vmatprep.mubr.f32.mxu0 0.0
    %806 = vmatmul.mubr.f32.gmra.mrb[0].mxu0 %v638
    %v807 = vpop.f32.mrb[0].mxu0
    %v808 = vadd.f32 %v612, %v807
    %v809 = vpop.f32.mrb[0].mxu0
    %810 = vmatprep.mubr.f32.mxu0 0.0
    %811 = vmatmul.mubr.f32.gmra.mrb[0].mxu0 %v641
    %v812 = vpop.f32.mrb[0].mxu0
    %v813 = vadd.f32 %v613, %v812
    %v814 = vpop.f32.mrb[0].mxu0
    %815 = vmatprep.mubr.f32.mxu0 0.0
    %816 = vmatmul.mubr.f32.gmra.mrb[0].mxu0 %v644
    %v817 = vpop.f32.mrb[0].mxu0
    %v818 = vadd.f32 %v614, %v817
    %v819 = vpop.f32.mrb[0].mxu0
    %820 = vmatprep.mubr.f32.mxu0 0.0
    %821 = vmatmul.mubr.f32.gmra.mrb[0].mxu0 %v647
    %v822 = vpop.f32.mrb[0].mxu0
    %v823 = vadd.f32 %v615, %v822
    %v824 = vpop.f32.mrb[0].mxu0
    %825 = vmatprep.mubr.f32.mxu0 0.0
    %826 = vmatmul.mubr.f32.gmra.mrb[0].mxu0 %v650
    %v827 = vpop.f32.mrb[0].mxu0
    %v828 = vadd.f32 %v616, %v827
    %v829 = vpop.f32.mrb[0].mxu0
    %830 = vmatprep.mubr.f32.mxu0 0.0
    %831 = vmatmul.mubr.f32.gmra.mrb[0].mxu0 %v653
    %v832 = vpop.f32.mrb[0].mxu0
    %v833 = vadd.f32 %v617, %v832
    %v834 = vpop.f32.mrb[0].mxu0
    %835 = vmatprep.mubr.f32.mxu0 0.0
    %836 = vmatmul.mubr.f32.gmra.mrb[0].mxu0 %v656
    %v837 = vpop.f32.mrb[0].mxu0
    %v838 = vadd.f32 %v618, %v837
    %v839 = vpop.f32.mrb[0].mxu0
    %840 = vmatprep.mubr.f32.mxu0 0.0
    %841 = vmatmul.mubr.f32.gmra.mrb[0].mxu0 %v659
    %v842 = vpop.f32.mrb[0].mxu0
    %v843 = vadd.f32 %v619, %v842
    %v844 = vpop.f32.mrb[0].mxu0
    %845 = vmatprep.mubr.f32.mxu0 0.0
    %846 = vmatmul.mubr.f32.gmra.mrb[0].mxu0 %v662
    %v847 = vpop.f32.mrb[0].mxu0
    %v848 = vadd.f32 %v620, %v847
    %v849 = vpop.f32.mrb[0].mxu0
    %850 = vmatprep.mubr.f32.mxu0 0.0
    %851 = vmatmul.mubr.f32.gmra.mrb[0].mxu0 %v665
    %v852 = vpop.f32.mrb[0].mxu0
    %v853 = vadd.f32 %v621, %v852
    %v854 = vpop.f32.mrb[0].mxu0
    %855 = vmatprep.mubr.f32.mxu0 0.0
    %856 = vmatmul.mubr.f32.gmra.mrb[0].mxu0 %v668
    %v857 = vpop.f32.mrb[0].mxu0
    %v858 = vadd.f32 %v622, %v857
    %v859 = vpop.f32.mrb[0].mxu0
    %860 = vmatprep.mubr.f32.mxu0 0.0
    %861 = vmatmul.mubr.f32.gmra.mrb[0].mxu0 %v671
    %v862 = vpop.f32.mrb[0].mxu0
    %v863 = vadd.f32 %v623, %v862
    %v864 = vpop.f32.mrb[0].mxu0
    %865 = vdwg.mxu0
    %v867 = vsel %vm624, %v530, 0
    %v870 = vsel %vm624, %v535, 0
    %v873 = vsel %vm624, %v540, 0
    %v876 = vsel %vm624, %v545, 0
    %v879 = vsel %vm624, %v550, 0
    %v882 = vsel %vm624, %v555, 0
    %v885 = vsel %vm624, %v560, 0
    %v888 = vsel %vm624, %v565, 0
    %v891 = vsel %vm624, %v570, 0
    %v894 = vsel %vm624, %v575, 0
    %v897 = vsel %vm624, %v580, 0
    %v900 = vsel %vm624, %v585, 0
    %v903 = vsel %vm624, %v590, 0
    %v906 = vsel %vm624, %v595, 0
    %v909 = vsel %vm624, %v600, 0
    %v912 = vsel %vm624, %v605, 0
    %v915 = vsel %vm624, %v301, 0
    %v918 = vsel %vm624, %v306, 0
    %v921 = vsel %vm624, %v311, 0
    %v924 = vsel %vm624, %v316, 0
    %v927 = vsel %vm624, %v321, 0
    %v930 = vsel %vm624, %v326, 0
    %v933 = vsel %vm624, %v331, 0
    %v936 = vsel %vm624, %v336, 0
    %v939 = vsel %vm624, %v341, 0
    %v942 = vsel %vm624, %v346, 0
    %v945 = vsel %vm624, %v351, 0
    %v948 = vsel %vm624, %v356, 0
    %v951 = vsel %vm624, %v361, 0
    %v954 = vsel %vm624, %v366, 0
    %v957 = vsel %vm624, %v371, 0
    %v960 = vsel %vm624, %v376, 0
    %962 = vmatprep.subr.mxu0 0.0
    %963 = vmatpush1.xpose.msra.mxu0 %v915
    %964 = vmatprep.subr.mxu0 0.0
    %965 = vmatpush1.xpose.msra.mxu0 %v918
    %966 = vmatprep.subr.mxu0 0.0
    %967 = vmatpush1.xpose.msra.mxu0 %v921
    %968 = vmatprep.subr.mxu0 0.0
    %969 = vmatpush1.xpose.msra.mxu0 %v924
    %970 = vmatprep.subr.mxu0 0.0
    %971 = vmatpush1.xpose.msra.mxu0 %v927
    %972 = vmatprep.subr.mxu0 0.0
    %973 = vmatpush1.xpose.msra.mxu0 %v930
    %974 = vmatprep.subr.mxu0 0.0
    %975 = vmatpush1.xpose.msra.mxu0 %v933
    %976 = vmatprep.subr.mxu0 0.0
    %977 = vmatpush1.xpose.msra.mxu0 %v936
    %978 = vmatprep.subr.mxu0 0.0
    %979 = vmatpush1.xpose.msra.mxu0 %v939
    %980 = vmatprep.subr.mxu0 0.0
    %981 = vmatpush1.xpose.msra.mxu0 %v942
    %982 = vmatprep.subr.mxu0 0.0
    %983 = vmatpush1.xpose.msra.mxu0 %v945
    %984 = vmatprep.subr.mxu0 0.0
    %985 = vmatpush1.xpose.msra.mxu0 %v948
    %986 = vmatprep.subr.mxu0 0.0
    %987 = vmatpush1.xpose.msra.mxu0 %v951
    %988 = vmatprep.subr.mxu0 0.0
    %989 = vmatpush1.xpose.msra.mxu0 %v954
    %990 = vmatprep.subr.mxu0 0.0
    %991 = vmatpush1.xpose.msra.mxu0 %v957
    %992 = vmatprep.subr.mxu0 0.0
    %993 = vmatpush1.xpose.msra.mxu0 %v960
    %994 = vmatprep.subr.mxu0 0.0
    %995 = vmatpush1.xpose.msra.mxu0 0.0
    %996 = vmatprep.subr.mxu0 0.0
    %997 = vmatpush1.xpose.msra.mxu0 0.0
    %998 = vmatprep.subr.mxu0 0.0
    %999 = vmatpush1.xpose.msra.mxu0 0.0
    %1000 = vmatprep.subr.mxu0 0.0
    %1001 = vmatpush1.xpose.msra.mxu0 0.0
    %1002 = vmatprep.subr.mxu0 0.0
    %1003 = vmatpush1.xpose.msra.mxu0 0.0
    %1004 = vmatprep.subr.mxu0 0.0
    %1005 = vmatpush1.xpose.msra.mxu0 0.0
    %1006 = vmatprep.subr.mxu0 0.0
    %1007 = vmatpush1.xpose.msra.mxu0 0.0
    %1008 = vmatprep.subr.mxu0 0.0
    %1009 = vmatpush1.xpose.msra.mxu0 0.0
    %1010 = vmatprep.subr.mxu0 0.0
    %1011 = vmatpush1.xpose.msra.mxu0 0.0
    %1012 = vmatprep.subr.mxu0 0.0
    %1013 = vmatpush1.xpose.msra.mxu0 0.0
    %1014 = vmatprep.subr.mxu0 0.0
    %1015 = vmatpush1.xpose.msra.mxu0 0.0
    %1016 = vmatprep.subr.mxu0 0.0
    %1017 = vmatpush1.xpose.msra.mxu0 0.0
    %1018 = vmatprep.subr.mxu0 0.0
    %1019 = vmatpush1.xpose.msra.mxu0 0.0
    %1020 = vmatprep.subr.mxu0 0.0
    %1021 = vmatpush1.xpose.msra.mxu0 0.0
    %1022 = vmatprep.subr.mxu0 0.0
    %1023 = vmatpush1.xpose.msra.mxu0 0.0
    %1024 = vmatprep.subr.mxu0 0.0
    %1025 = vmatpush1.xpose.msra.mxu0 0.0
    %1026 = vmatprep.mubr.f32.mxu0 0.0
    %1027 = vmatmul.mubr.f32.gmra.mrb[0].mxu0 %v867
    %v1028 = vpop.f32.mrb[0].mxu0
    %v1029 = vadd.f32 %v608, %v1028
    %v1030 = vpop.f32.mrb[0].mxu0
    %1031 = vmatprep.mubr.f32.mxu0 0.0
    %1032 = vmatmul.mubr.f32.gmra.mrb[0].mxu0 %v870
    %v1033 = vpop.f32.mrb[0].mxu0
    %v1034 = vadd.f32 %v609, %v1033
    %v1035 = vpop.f32.mrb[0].mxu0
    %1036 = vmatprep.mubr.f32.mxu0 0.0
    %1037 = vmatmul.mubr.f32.gmra.mrb[0].mxu0 %v873
    %v1038 = vpop.f32.mrb[0].mxu0
    %v1039 = vadd.f32 %v610, %v1038
    %v1040 = vpop.f32.mrb[0].mxu0
    %1041 = vmatprep.mubr.f32.mxu0 0.0
    %1042 = vmatmul.mubr.f32.gmra.mrb[0].mxu0 %v876
    %v1043 = vpop.f32.mrb[0].mxu0
    %v1044 = vadd.f32 %v611, %v1043
    %v1045 = vpop.f32.mrb[0].mxu0
    %1046 = vmatprep.mubr.f32.mxu0 0.0
    %1047 = vmatmul.mubr.f32.gmra.mrb[0].mxu0 %v879
    %v1048 = vpop.f32.mrb[0].mxu0
    %v1049 = vadd.f32 %v612, %v1048
    %v1050 = vpop.f32.mrb[0].mxu0
    %1051 = vmatprep.mubr.f32.mxu0 0.0
    %1052 = vmatmul.mubr.f32.gmra.mrb[0].mxu0 %v882
    %v1053 = vpop.f32.mrb[0].mxu0
    %v1054 = vadd.f32 %v613, %v1053
    %v1055 = vpop.f32.mrb[0].mxu0
    %1056 = vmatprep.mubr.f32.mxu0 0.0
    %1057 = vmatmul.mubr.f32.gmra.mrb[0].mxu0 %v885
    %v1058 = vpop.f32.mrb[0].mxu0
    %v1059 = vadd.f32 %v614, %v1058
    %v1060 = vpop.f32.mrb[0].mxu0
    %1061 = vmatprep.mubr.f32.mxu0 0.0
    %1062 = vmatmul.mubr.f32.gmra.mrb[0].mxu0 %v888
    %v1063 = vpop.f32.mrb[0].mxu0
    %v1064 = vadd.f32 %v615, %v1063
    %v1065 = vpop.f32.mrb[0].mxu0
    %1066 = vmatprep.mubr.f32.mxu0 0.0
    %1067 = vmatmul.mubr.f32.gmra.mrb[0].mxu0 %v891
    %v1068 = vpop.f32.mrb[0].mxu0
    %v1069 = vadd.f32 %v616, %v1068
    %v1070 = vpop.f32.mrb[0].mxu0
    %1071 = vmatprep.mubr.f32.mxu0 0.0
    %1072 = vmatmul.mubr.f32.gmra.mrb[0].mxu0 %v894
    %v1073 = vpop.f32.mrb[0].mxu0
    %v1074 = vadd.f32 %v617, %v1073
    %v1075 = vpop.f32.mrb[0].mxu0
    %1076 = vmatprep.mubr.f32.mxu0 0.0
    %1077 = vmatmul.mubr.f32.gmra.mrb[0].mxu0 %v897
    %v1078 = vpop.f32.mrb[0].mxu0
    %v1079 = vadd.f32 %v618, %v1078
    %v1080 = vpop.f32.mrb[0].mxu0
    %1081 = vmatprep.mubr.f32.mxu0 0.0
    %1082 = vmatmul.mubr.f32.gmra.mrb[0].mxu0 %v900
    %v1083 = vpop.f32.mrb[0].mxu0
    %v1084 = vadd.f32 %v619, %v1083
    %v1085 = vpop.f32.mrb[0].mxu0
    %1086 = vmatprep.mubr.f32.mxu0 0.0
    %1087 = vmatmul.mubr.f32.gmra.mrb[0].mxu0 %v903
    %v1088 = vpop.f32.mrb[0].mxu0
    %v1089 = vadd.f32 %v620, %v1088
    %v1090 = vpop.f32.mrb[0].mxu0
    %1091 = vmatprep.mubr.f32.mxu0 0.0
    %1092 = vmatmul.mubr.f32.gmra.mrb[0].mxu0 %v906
    %v1093 = vpop.f32.mrb[0].mxu0
    %v1094 = vadd.f32 %v621, %v1093
    %v1095 = vpop.f32.mrb[0].mxu0
    %1096 = vmatprep.mubr.f32.mxu0 0.0
    %1097 = vmatmul.mubr.f32.gmra.mrb[0].mxu0 %v909
    %v1098 = vpop.f32.mrb[0].mxu0
    %v1099 = vadd.f32 %v622, %v1098
    %v1100 = vpop.f32.mrb[0].mxu0
    %1101 = vmatprep.mubr.f32.mxu0 0.0
    %1102 = vmatmul.mubr.f32.gmra.mrb[0].mxu0 %v912
    %v1103 = vpop.f32.mrb[0].mxu0
    %v1104 = vadd.f32 %v623, %v1103
    %v1105 = vpop.f32.mrb[0].mxu0
    %1106 = vdwg.mxu0
    %v1107 = vxor.u32 %v788, 2147483648
    %v1108 = vxor.u32 %v793, 2147483648
    %v1109 = vxor.u32 %v798, 2147483648
    %v1110 = vxor.u32 %v803, 2147483648
    %v1111 = vxor.u32 %v808, 2147483648
    %v1112 = vxor.u32 %v813, 2147483648
    %v1113 = vxor.u32 %v818, 2147483648
    %v1114 = vxor.u32 %v823, 2147483648
    %v1115 = vxor.u32 %v828, 2147483648
    %v1116 = vxor.u32 %v833, 2147483648
    %v1117 = vxor.u32 %v838, 2147483648
    %v1118 = vxor.u32 %v843, 2147483648
    %v1119 = vxor.u32 %v848, 2147483648
    %v1120 = vxor.u32 %v853, 2147483648
    %v1121 = vxor.u32 %v858, 2147483648
    %v1122 = vxor.u32 %v863, 2147483648
    %v1123 = vxor.u32 %v1029, 2147483648
    %v1124 = vxor.u32 %v1034, 2147483648
    %v1125 = vxor.u32 %v1039, 2147483648
    %v1126 = vxor.u32 %v1044, 2147483648
    %v1127 = vxor.u32 %v1049, 2147483648
    %v1128 = vxor.u32 %v1054, 2147483648
    %v1129 = vxor.u32 %v1059, 2147483648
    %v1130 = vxor.u32 %v1064, 2147483648
    %v1131 = vxor.u32 %v1069, 2147483648
    %v1132 = vxor.u32 %v1074, 2147483648
    %v1133 = vxor.u32 %v1079, 2147483648
    %v1134 = vxor.u32 %v1084, 2147483648
    %v1135 = vxor.u32 %v1089, 2147483648
    %v1136 = vxor.u32 %v1094, 2147483648
    %v1137 = vxor.u32 %v1099, 2147483648
    %v1138 = vxor.u32 %v1104, 2147483648
    %v1139 = vmul.f32 %v1107, 1.442695
    %v1140 = vpow.pop %v1139
    %v1141 = vmul.f32 %v1108, 1.442695
    %v1142 = vpow.pop %v1141
    %v1143 = vmul.f32 %v1109, 1.442695
    %v1144 = vpow.pop %v1143
    %v1145 = vmul.f32 %v1110, 1.442695
    %v1146 = vpow.pop %v1145
    %v1147 = vmul.f32 %v1111, 1.442695
    %v1148 = vpow.pop %v1147
    %v1149 = vmul.f32 %v1112, 1.442695
    %v1150 = vpow.pop %v1149
    %v1151 = vmul.f32 %v1113, 1.442695
    %v1152 = vpow.pop %v1151
    %v1153 = vmul.f32 %v1114, 1.442695
    %v1154 = vpow.pop %v1153
    %v1155 = vmul.f32 %v1115, 1.442695
    %v1156 = vpow.pop %v1155
    %v1157 = vmul.f32 %v1116, 1.442695
    %v1158 = vpow.pop %v1157
    %v1159 = vmul.f32 %v1117, 1.442695
    %v1160 = vpow.pop %v1159
    %v1161 = vmul.f32 %v1118, 1.442695
    %v1162 = vpow.pop %v1161
    %v1163 = vmul.f32 %v1119, 1.442695
    %v1164 = vpow.pop %v1163
    %v1165 = vmul.f32 %v1120, 1.442695
    %v1166 = vpow.pop %v1165
    %v1167 = vmul.f32 %v1121, 1.442695
    %v1168 = vpow.pop %v1167
    %v1169 = vmul.f32 %v1122, 1.442695
    %v1170 = vpow.pop %v1169
    %v1171 = vmul.f32 %v1123, 1.442695
    %v1172 = vpow.pop %v1171
    %v1173 = vmul.f32 %v1124, 1.442695
    %v1174 = vpow.pop %v1173
    %v1175 = vmul.f32 %v1125, 1.442695
    %v1176 = vpow.pop %v1175
    %v1177 = vmul.f32 %v1126, 1.442695
    %v1178 = vpow.pop %v1177
    %v1179 = vmul.f32 %v1127, 1.442695
    %v1180 = vpow.pop %v1179
    %v1181 = vmul.f32 %v1128, 1.442695
    %v1182 = vpow.pop %v1181
    %v1183 = vmul.f32 %v1129, 1.442695
    %v1184 = vpow.pop %v1183
    %v1185 = vmul.f32 %v1130, 1.442695
    %v1186 = vpow.pop %v1185
    %v1187 = vmul.f32 %v1131, 1.442695
    %v1188 = vpow.pop %v1187
    %v1189 = vmul.f32 %v1132, 1.442695
    %v1190 = vpow.pop %v1189
    %v1191 = vmul.f32 %v1133, 1.442695
    %v1192 = vpow.pop %v1191
    %v1193 = vmul.f32 %v1134, 1.442695
    %v1194 = vpow.pop %v1193
    %v1195 = vmul.f32 %v1135, 1.442695
    %v1196 = vpow.pop %v1195
    %v1197 = vmul.f32 %v1136, 1.442695
    %v1198 = vpow.pop %v1197
    %v1199 = vmul.f32 %v1137, 1.442695
    %v1200 = vpow.pop %v1199
    %v1201 = vmul.f32 %v1138, 1.442695
    %v1202 = vpow.pop %v1201
    %v1203 = vadd.f32 %v1140, 1.0
    %v1204 = vadd.f32 %v1142, 1.0
    %v1205 = vadd.f32 %v1144, 1.0
    %v1206 = vadd.f32 %v1146, 1.0
    %v1207 = vadd.f32 %v1148, 1.0
    %v1208 = vadd.f32 %v1150, 1.0
    %v1209 = vadd.f32 %v1152, 1.0
    %v1210 = vadd.f32 %v1154, 1.0
    %v1211 = vadd.f32 %v1156, 1.0
    %v1212 = vadd.f32 %v1158, 1.0
    %v1213 = vadd.f32 %v1160, 1.0
    %v1214 = vadd.f32 %v1162, 1.0
    %v1215 = vadd.f32 %v1164, 1.0
    %v1216 = vadd.f32 %v1166, 1.0
    %v1217 = vadd.f32 %v1168, 1.0
    %v1218 = vadd.f32 %v1170, 1.0
    %v1219 = vadd.f32 %v1172, 1.0
    %v1220 = vadd.f32 %v1174, 1.0
    %v1221 = vadd.f32 %v1176, 1.0
    %v1222 = vadd.f32 %v1178, 1.0
    %v1223 = vadd.f32 %v1180, 1.0
    %v1224 = vadd.f32 %v1182, 1.0
    %v1225 = vadd.f32 %v1184, 1.0
    %v1226 = vadd.f32 %v1186, 1.0
    %v1227 = vadd.f32 %v1188, 1.0
    %v1228 = vadd.f32 %v1190, 1.0
    %v1229 = vadd.f32 %v1192, 1.0
    %v1230 = vadd.f32 %v1194, 1.0
    %v1231 = vadd.f32 %v1196, 1.0
    %v1232 = vadd.f32 %v1198, 1.0
    %v1233 = vadd.f32 %v1200, 1.0
    %v1234 = vadd.f32 %v1202, 1.0
    %v1235 = vrcp.pop %v1203
    %v1236 = vmul.f32 1.0, %v1235
    %v1237 = vrcp.pop %v1204
    %v1238 = vmul.f32 1.0, %v1237
    %v1239 = vrcp.pop %v1205
    %v1240 = vmul.f32 1.0, %v1239
    %v1241 = vrcp.pop %v1206
    %v1242 = vmul.f32 1.0, %v1241
    %v1243 = vrcp.pop %v1207
    %v1244 = vmul.f32 1.0, %v1243
    %v1245 = vrcp.pop %v1208
    %v1246 = vmul.f32 1.0, %v1245
    %v1247 = vrcp.pop %v1209
    %v1248 = vmul.f32 1.0, %v1247
    %v1249 = vrcp.pop %v1210
    %v1250 = vmul.f32 1.0, %v1249
    %v1251 = vrcp.pop %v1211
    %v1252 = vmul.f32 1.0, %v1251
    %v1253 = vrcp.pop %v1212
    %v1254 = vmul.f32 1.0, %v1253
    %v1255 = vrcp.pop %v1213
    %v1256 = vmul.f32 1.0, %v1255
    %v1257 = vrcp.pop %v1214
    %v1258 = vmul.f32 1.0, %v1257
    %v1259 = vrcp.pop %v1215
    %v1260 = vmul.f32 1.0, %v1259
    %v1261 = vrcp.pop %v1216
    %v1262 = vmul.f32 1.0, %v1261
    %v1263 = vrcp.pop %v1217
    %v1264 = vmul.f32 1.0, %v1263
    %v1265 = vrcp.pop %v1218
    %v1266 = vmul.f32 1.0, %v1265
    %v1267 = vrcp.pop %v1219
    %v1268 = vmul.f32 1.0, %v1267
    %v1269 = vrcp.pop %v1220
    %v1270 = vmul.f32 1.0, %v1269
    %v1271 = vrcp.pop %v1221
    %v1272 = vmul.f32 1.0, %v1271
    %v1273 = vrcp.pop %v1222
    %v1274 = vmul.f32 1.0, %v1273
    %v1275 = vrcp.pop %v1223
    %v1276 = vmul.f32 1.0, %v1275
    %v1277 = vrcp.pop %v1224
    %v1278 = vmul.f32 1.0, %v1277
    %v1279 = vrcp.pop %v1225
    %v1280 = vmul.f32 1.0, %v1279
    %v1281 = vrcp.pop %v1226
    %v1282 = vmul.f32 1.0, %v1281
    %v1283 = vrcp.pop %v1227
    %v1284 = vmul.f32 1.0, %v1283
    %v1285 = vrcp.pop %v1228
    %v1286 = vmul.f32 1.0, %v1285
    %v1287 = vrcp.pop %v1229
    %v1288 = vmul.f32 1.0, %v1287
    %v1289 = vrcp.pop %v1230
    %v1290 = vmul.f32 1.0, %v1289
    %v1291 = vrcp.pop %v1231
    %v1292 = vmul.f32 1.0, %v1291
    %v1293 = vrcp.pop %v1232
    %v1294 = vmul.f32 1.0, %v1293
    %v1295 = vrcp.pop %v1233
    %v1296 = vmul.f32 1.0, %v1295
    %v1297 = vrcp.pop %v1234
    %v1298 = vmul.f32 1.0, %v1297
    %v1299 = vld [vmem:[%s4] sm:$0xff]
    %v1300 = vld [vmem:[%s4 + $0x8] sm:$0xff]
    %v1301 = vld [vmem:[%s4 + $0x10] sm:$0xff]
    %v1302 = vld [vmem:[%s4 + $0x18] sm:$0xff]
    %v1303 = vld [vmem:[%s4 + $0x20] sm:$0xff]
    %v1304 = vld [vmem:[%s4 + $0x28] sm:$0xff]
    %v1305 = vld [vmem:[%s4 + $0x30] sm:$0xff]
    %v1306 = vld [vmem:[%s4 + $0x38] sm:$0xff]
    %v1307 = vld [vmem:[%s4 + $0x40] sm:$0xff]
    %v1308 = vld [vmem:[%s4 + $0x48] sm:$0xff]
    %v1309 = vld [vmem:[%s4 + $0x50] sm:$0xff]
    %v1310 = vld [vmem:[%s4 + $0x58] sm:$0xff]
    %v1311 = vld [vmem:[%s4 + $0x60] sm:$0xff]
    %v1312 = vld [vmem:[%s4 + $0x68] sm:$0xff]
    %v1313 = vld [vmem:[%s4 + $0x70] sm:$0xff]
    %v1314 = vld [vmem:[%s4 + $0x78] sm:$0xff]
    %1315 = vmatprep.subr.mxu0 0.0
    %1316 = vmatpush1.msra.mxu0 %v1299
    %1317 = vmatprep.subr.mxu0 0.0
    %1318 = vmatpush1.msra.mxu0 %v1300
    %1319 = vmatprep.subr.mxu0 0.0
    %1320 = vmatpush1.msra.mxu0 %v1301
    %1321 = vmatprep.subr.mxu0 0.0
    %1322 = vmatpush1.msra.mxu0 %v1302
    %1323 = vmatprep.subr.mxu0 0.0
    %1324 = vmatpush1.msra.mxu0 %v1303
    %1325 = vmatprep.subr.mxu0 0.0
    %1326 = vmatpush1.msra.mxu0 %v1304
    %1327 = vmatprep.subr.mxu0 0.0
    %1328 = vmatpush1.msra.mxu0 %v1305
    %1329 = vmatprep.subr.mxu0 0.0
    %1330 = vmatpush1.msra.mxu0 %v1306
    %1331 = vmatprep.subr.mxu0 0.0
    %1332 = vmatpush1.msra.mxu0 %v1307
    %1333 = vmatprep.subr.mxu0 0.0
    %1334 = vmatpush1.msra.mxu0 %v1308
    %1335 = vmatprep.subr.mxu0 0.0
    %1336 = vmatpush1.msra.mxu0 %v1309
    %1337 = vmatprep.subr.mxu0 0.0
    %1338 = vmatpush1.msra.mxu0 %v1310
    %1339 = vmatprep.subr.mxu0 0.0
    %1340 = vmatpush1.msra.mxu0 %v1311
    %1341 = vmatprep.subr.mxu0 0.0
    %1342 = vmatpush1.msra.mxu0 %v1312
    %1343 = vmatprep.subr.mxu0 0.0
    %1344 = vmatpush1.msra.mxu0 %v1313
    %1345 = vmatprep.subr.mxu0 0.0
    %1346 = vmatpush1.msra.mxu0 %v1314
    %1347 = vmatprep.subr.mxu0 0.0
    %1348 = vmatpush1.msra.mxu0 0.0
    %1349 = vmatprep.subr.mxu0 0.0
    %1350 = vmatpush1.msra.mxu0 0.0
    %1351 = vmatprep.subr.mxu0 0.0
    %1352 = vmatpush1.msra.mxu0 0.0
    %1353 = vmatprep.subr.mxu0 0.0
    %1354 = vmatpush1.msra.mxu0 0.0
    %1355 = vmatprep.subr.mxu0 0.0
    %1356 = vmatpush1.msra.mxu0 0.0
    %1357 = vmatprep.subr.mxu0 0.0
    %1358 = vmatpush1.msra.mxu0 0.0
    %1359 = vmatprep.subr.mxu0 0.0
    %1360 = vmatpush1.msra.mxu0 0.0
    %1361 = vmatprep.subr.mxu0 0.0
    %1362 = vmatpush1.msra.mxu0 0.0
    %1363 = vmatprep.subr.mxu0 0.0
    %1364 = vmatpush1.msra.mxu0 0.0
    %1365 = vmatprep.subr.mxu0 0.0
    %1366 = vmatpush1.msra.mxu0 0.0
    %1367 = vmatprep.subr.mxu0 0.0
    %1368 = vmatpush1.msra.mxu0 0.0
    %1369 = vmatprep.subr.mxu0 0.0
    %1370 = vmatpush1.msra.mxu0 0.0
    %1371 = vmatprep.subr.mxu0 0.0
    %1372 = vmatpush1.msra.mxu0 0.0
    %1373 = vmatprep.subr.mxu0 0.0
    %1374 = vmatpush1.msra.mxu0 0.0
    %1375 = vmatprep.subr.mxu0 0.0
    %1376 = vmatpush1.msra.mxu0 0.0
    %1377 = vmatprep.subr.mxu0 0.0
    %1378 = vmatpush1.msra.mxu0 0.0
    %1379 = vmatprep.mubr.f32.mxu0 0.0
    %1380 = vmatmul.mubr.f32.gmra.mrb[0].mxu0 %v1236
    %v1381 = vpop.f32.mrb[0].mxu0
    %v1382 = vadd.f32 0.0, %v1381
    %v1383 = vpop.f32.mrb[0].mxu0
    %1384 = vmatprep.mubr.f32.mxu0 0.0
    %1385 = vmatmul.mubr.f32.gmra.mrb[0].mxu0 %v1238
    %v1386 = vpop.f32.mrb[0].mxu0
    %v1387 = vadd.f32 0.0, %v1386
    %v1388 = vpop.f32.mrb[0].mxu0
    %1389 = vmatprep.mubr.f32.mxu0 0.0
    %1390 = vmatmul.mubr.f32.gmra.mrb[0].mxu0 %v1240
    %v1391 = vpop.f32.mrb[0].mxu0
    %v1392 = vadd.f32 0.0, %v1391
    %v1393 = vpop.f32.mrb[0].mxu0
    %1394 = vmatprep.mubr.f32.mxu0 0.0
    %1395 = vmatmul.mubr.f32.gmra.mrb[0].mxu0 %v1242
    %v1396 = vpop.f32.mrb[0].mxu0
    %v1397 = vadd.f32 0.0, %v1396
    %v1398 = vpop.f32.mrb[0].mxu0
    %1399 = vmatprep.mubr.f32.mxu0 0.0
    %1400 = vmatmul.mubr.f32.gmra.mrb[0].mxu0 %v1244
    %v1401 = vpop.f32.mrb[0].mxu0
    %v1402 = vadd.f32 0.0, %v1401
    %v1403 = vpop.f32.mrb[0].mxu0
    %1404 = vmatprep.mubr.f32.mxu0 0.0
    %1405 = vmatmul.mubr.f32.gmra.mrb[0].mxu0 %v1246
    %v1406 = vpop.f32.mrb[0].mxu0
    %v1407 = vadd.f32 0.0, %v1406
    %v1408 = vpop.f32.mrb[0].mxu0
    %1409 = vmatprep.mubr.f32.mxu0 0.0
    %1410 = vmatmul.mubr.f32.gmra.mrb[0].mxu0 %v1248
    %v1411 = vpop.f32.mrb[0].mxu0
    %v1412 = vadd.f32 0.0, %v1411
    %v1413 = vpop.f32.mrb[0].mxu0
    %1414 = vmatprep.mubr.f32.mxu0 0.0
    %1415 = vmatmul.mubr.f32.gmra.mrb[0].mxu0 %v1250
    %v1416 = vpop.f32.mrb[0].mxu0
    %v1417 = vadd.f32 0.0, %v1416
    %v1418 = vpop.f32.mrb[0].mxu0
    %1419 = vmatprep.mubr.f32.mxu0 0.0
    %1420 = vmatmul.mubr.f32.gmra.mrb[0].mxu0 %v1252
    %v1421 = vpop.f32.mrb[0].mxu0
    %v1422 = vadd.f32 0.0, %v1421
    %v1423 = vpop.f32.mrb[0].mxu0
    %1424 = vmatprep.mubr.f32.mxu0 0.0
    %1425 = vmatmul.mubr.f32.gmra.mrb[0].mxu0 %v1254
    %v1426 = vpop.f32.mrb[0].mxu0
    %v1427 = vadd.f32 0.0, %v1426
    %v1428 = vpop.f32.mrb[0].mxu0
    %1429 = vmatprep.mubr.f32.mxu0 0.0
    %1430 = vmatmul.mubr.f32.gmra.mrb[0].mxu0 %v1256
    %v1431 = vpop.f32.mrb[0].mxu0
    %v1432 = vadd.f32 0.0, %v1431
    %v1433 = vpop.f32.mrb[0].mxu0
    %1434 = vmatprep.mubr.f32.mxu0 0.0
    %1435 = vmatmul.mubr.f32.gmra.mrb[0].mxu0 %v1258
    %v1436 = vpop.f32.mrb[0].mxu0
    %v1437 = vadd.f32 0.0, %v1436
    %v1438 = vpop.f32.mrb[0].mxu0
    %1439 = vmatprep.mubr.f32.mxu0 0.0
    %1440 = vmatmul.mubr.f32.gmra.mrb[0].mxu0 %v1260
    %v1441 = vpop.f32.mrb[0].mxu0
    %v1442 = vadd.f32 0.0, %v1441
    %v1443 = vpop.f32.mrb[0].mxu0
    %1444 = vmatprep.mubr.f32.mxu0 0.0
    %1445 = vmatmul.mubr.f32.gmra.mrb[0].mxu0 %v1262
    %v1446 = vpop.f32.mrb[0].mxu0
    %v1447 = vadd.f32 0.0, %v1446
    %v1448 = vpop.f32.mrb[0].mxu0
    %1449 = vmatprep.mubr.f32.mxu0 0.0
    %1450 = vmatmul.mubr.f32.gmra.mrb[0].mxu0 %v1264
    %v1451 = vpop.f32.mrb[0].mxu0
    %v1452 = vadd.f32 0.0, %v1451
    %v1453 = vpop.f32.mrb[0].mxu0
    %1454 = vmatprep.mubr.f32.mxu0 0.0
    %1455 = vmatmul.mubr.f32.gmra.mrb[0].mxu0 %v1266
    %v1456 = vpop.f32.mrb[0].mxu0
    %v1457 = vadd.f32 0.0, %v1456
    %v1458 = vpop.f32.mrb[0].mxu0
    %1459 = vmatprep.mubr.f32.mxu0 0.0
    %1460 = vmatmul.mubr.f32.gmra.mrb[0].mxu0 %v1268
    %v1461 = vpop.f32.mrb[0].mxu0
    %v1462 = vadd.f32 0.0, %v1461
    %v1463 = vpop.f32.mrb[0].mxu0
    %1464 = vmatprep.mubr.f32.mxu0 0.0
    %1465 = vmatmul.mubr.f32.gmra.mrb[0].mxu0 %v1270
    %v1466 = vpop.f32.mrb[0].mxu0
    %v1467 = vadd.f32 0.0, %v1466
    %v1468 = vpop.f32.mrb[0].mxu0
    %1469 = vmatprep.mubr.f32.mxu0 0.0
    %1470 = vmatmul.mubr.f32.gmra.mrb[0].mxu0 %v1272
    %v1471 = vpop.f32.mrb[0].mxu0
    %v1472 = vadd.f32 0.0, %v1471
    %v1473 = vpop.f32.mrb[0].mxu0
    %1474 = vmatprep.mubr.f32.mxu0 0.0
    %1475 = vmatmul.mubr.f32.gmra.mrb[0].mxu0 %v1274
    %v1476 = vpop.f32.mrb[0].mxu0
    %v1477 = vadd.f32 0.0, %v1476
    %v1478 = vpop.f32.mrb[0].mxu0
    %1479 = vmatprep.mubr.f32.mxu0 0.0
    %1480 = vmatmul.mubr.f32.gmra.mrb[0].mxu0 %v1276
    %v1481 = vpop.f32.mrb[0].mxu0
    %v1482 = vadd.f32 0.0, %v1481
    %v1483 = vpop.f32.mrb[0].mxu0
    %1484 = vmatprep.mubr.f32.mxu0 0.0
    %1485 = vmatmul.mubr.f32.gmra.mrb[0].mxu0 %v1278
    %v1486 = vpop.f32.mrb[0].mxu0
    %v1487 = vadd.f32 0.0, %v1486
    %v1488 = vpop.f32.mrb[0].mxu0
    %1489 = vmatprep.mubr.f32.mxu0 0.0
    %1490 = vmatmul.mubr.f32.gmra.mrb[0].mxu0 %v1280
    %v1491 = vpop.f32.mrb[0].mxu0
    %v1492 = vadd.f32 0.0, %v1491
    %v1493 = vpop.f32.mrb[0].mxu0
    %1494 = vmatprep.mubr.f32.mxu0 0.0
    %1495 = vmatmul.mubr.f32.gmra.mrb[0].mxu0 %v1282
    %v1496 = vpop.f32.mrb[0].mxu0
    %v1497 = vadd.f32 0.0, %v1496
    %v1498 = vpop.f32.mrb[0].mxu0
    %1499 = vmatprep.mubr.f32.mxu0 0.0
    %1500 = vmatmul.mubr.f32.gmra.mrb[0].mxu0 %v1284
    %v1501 = vpop.f32.mrb[0].mxu0
    %v1502 = vadd.f32 0.0, %v1501
    %v1503 = vpop.f32.mrb[0].mxu0
    %1504 = vmatprep.mubr.f32.mxu0 0.0
    %1505 = vmatmul.mubr.f32.gmra.mrb[0].mxu0 %v1286
    %v1506 = vpop.f32.mrb[0].mxu0
    %v1507 = vadd.f32 0.0, %v1506
    %v1508 = vpop.f32.mrb[0].mxu0
    %1509 = vmatprep.mubr.f32.mxu0 0.0
    %1510 = vmatmul.mubr.f32.gmra.mrb[0].mxu0 %v1288
    %v1511 = vpop.f32.mrb[0].mxu0
    %v1512 = vadd.f32 0.0, %v1511
    %v1513 = vpop.f32.mrb[0].mxu0
    %1514 = vmatprep.mubr.f32.mxu0 0.0
    %1515 = vmatmul.mubr.f32.gmra.mrb[0].mxu0 %v1290
    %v1516 = vpop.f32.mrb[0].mxu0
    %v1517 = vadd.f32 0.0, %v1516
    %v1518 = vpop.f32.mrb[0].mxu0
    %1519 = vmatprep.mubr.f32.mxu0 0.0
    %1520 = vmatmul.mubr.f32.gmra.mrb[0].mxu0 %v1292
    %v1521 = vpop.f32.mrb[0].mxu0
    %v1522 = vadd.f32 0.0, %v1521
    %v1523 = vpop.f32.mrb[0].mxu0
    %1524 = vmatprep.mubr.f32.mxu0 0.0
    %1525 = vmatmul.mubr.f32.gmra.mrb[0].mxu0 %v1294
    %v1526 = vpop.f32.mrb[0].mxu0
    %v1527 = vadd.f32 0.0, %v1526
    %v1528 = vpop.f32.mrb[0].mxu0
    %1529 = vmatprep.mubr.f32.mxu0 0.0
    %1530 = vmatmul.mubr.f32.gmra.mrb[0].mxu0 %v1296
    %v1531 = vpop.f32.mrb[0].mxu0
    %v1532 = vadd.f32 0.0, %v1531
    %v1533 = vpop.f32.mrb[0].mxu0
    %1534 = vmatprep.mubr.f32.mxu0 0.0
    %1535 = vmatmul.mubr.f32.gmra.mrb[0].mxu0 %v1298
    %v1536 = vpop.f32.mrb[0].mxu0
    %v1537 = vadd.f32 0.0, %v1536
    %v1538 = vpop.f32.mrb[0].mxu0
    %1539 = vdwg.mxu0
    %v1540 = vlaneseq
    %v1541 = vand.u32 %v1540, 127
    %vm1542 = vcmp.lt.s32.totalorder %v1541, 16
    %v1543 = vsel %vm1542, 1, 0
    %vm1544 = vcmp.eq.s32.totalorder %v1543, 1
    %v1545 = vsel %vm1544, %v1382, -1e+30
    %v1546 = vsel %vm1544, %v1387, -1e+30
    %v1547 = vsel %vm1544, %v1392, -1e+30
    %v1548 = vsel %vm1544, %v1397, -1e+30
    %v1549 = vsel %vm1544, %v1402, -1e+30
    %v1550 = vsel %vm1544, %v1407, -1e+30
    %v1551 = vsel %vm1544, %v1412, -1e+30
    %v1552 = vsel %vm1544, %v1417, -1e+30
    %v1553 = vsel %vm1544, %v1422, -1e+30
    %v1554 = vsel %vm1544, %v1427, -1e+30
    %v1555 = vsel %vm1544, %v1432, -1e+30
    %v1556 = vsel %vm1544, %v1437, -1e+30
    %v1557 = vsel %vm1544, %v1442, -1e+30
    %v1558 = vsel %vm1544, %v1447, -1e+30
    %v1559 = vsel %vm1544, %v1452, -1e+30
    %v1560 = vsel %vm1544, %v1457, -1e+30
    %v1561 = vsel %vm1544, %v1462, -1e+30
    %v1562 = vsel %vm1544, %v1467, -1e+30
    %v1563 = vsel %vm1544, %v1472, -1e+30
    %v1564 = vsel %vm1544, %v1477, -1e+30
    %v1565 = vsel %vm1544, %v1482, -1e+30
    %v1566 = vsel %vm1544, %v1487, -1e+30
    %v1567 = vsel %vm1544, %v1492, -1e+30
    %v1568 = vsel %vm1544, %v1497, -1e+30
    %v1569 = vsel %vm1544, %v1502, -1e+30
    %v1570 = vsel %vm1544, %v1507, -1e+30
    %v1571 = vsel %vm1544, %v1512, -1e+30
    %v1572 = vsel %vm1544, %v1517, -1e+30
    %v1573 = vsel %vm1544, %v1522, -1e+30
    %v1574 = vsel %vm1544, %v1527, -1e+30
    %v1575 = vsel %vm1544, %v1532, -1e+30
    %v1576 = vsel %vm1544, %v1537, -1e+30
    %1577 = vmax.xlane.f32.xlu0 %v1545
    %v1578 = vpop.xlane.xlu0 %1577
    %1579 = vmax.xlane.f32.xlu0 %v1546
    %v1580 = vpop.xlane.xlu0 %1579
    %1581 = vmax.xlane.f32.xlu0 %v1547
    %v1582 = vpop.xlane.xlu0 %1581
    %1583 = vmax.xlane.f32.xlu0 %v1548
    %v1584 = vpop.xlane.xlu0 %1583
    %1585 = vmax.xlane.f32.xlu0 %v1549
    %v1586 = vpop.xlane.xlu0 %1585
    %1587 = vmax.xlane.f32.xlu0 %v1550
    %v1588 = vpop.xlane.xlu0 %1587
    %1589 = vmax.xlane.f32.xlu0 %v1551
    %v1590 = vpop.xlane.xlu0 %1589
    %1591 = vmax.xlane.f32.xlu0 %v1552
    %v1592 = vpop.xlane.xlu0 %1591
    %1593 = vmax.xlane.f32.xlu0 %v1553
    %v1594 = vpop.xlane.xlu0 %1593
    %1595 = vmax.xlane.f32.xlu0 %v1554
    %v1596 = vpop.xlane.xlu0 %1595
    %1597 = vmax.xlane.f32.xlu0 %v1555
    %v1598 = vpop.xlane.xlu0 %1597
    %1599 = vmax.xlane.f32.xlu0 %v1556
    %v1600 = vpop.xlane.xlu0 %1599
    %1601 = vmax.xlane.f32.xlu0 %v1557
    %v1602 = vpop.xlane.xlu0 %1601
    %1603 = vmax.xlane.f32.xlu0 %v1558
    %v1604 = vpop.xlane.xlu0 %1603
    %1605 = vmax.xlane.f32.xlu0 %v1559
    %v1606 = vpop.xlane.xlu0 %1605
    %1607 = vmax.xlane.f32.xlu0 %v1560
    %v1608 = vpop.xlane.xlu0 %1607
    %1609 = vmax.xlane.f32.xlu0 %v1561
    %v1610 = vpop.xlane.xlu0 %1609
    %1611 = vmax.xlane.f32.xlu0 %v1562
    %v1612 = vpop.xlane.xlu0 %1611
    %1613 = vmax.xlane.f32.xlu0 %v1563
    %v1614 = vpop.xlane.xlu0 %1613
    %1615 = vmax.xlane.f32.xlu0 %v1564
    %v1616 = vpop.xlane.xlu0 %1615
    %1617 = vmax.xlane.f32.xlu0 %v1565
    %v1618 = vpop.xlane.xlu0 %1617
    %1619 = vmax.xlane.f32.xlu0 %v1566
    %v1620 = vpop.xlane.xlu0 %1619
    %1621 = vmax.xlane.f32.xlu0 %v1567
    %v1622 = vpop.xlane.xlu0 %1621
    %1623 = vmax.xlane.f32.xlu0 %v1568
    %v1624 = vpop.xlane.xlu0 %1623
    %1625 = vmax.xlane.f32.xlu0 %v1569
    %v1626 = vpop.xlane.xlu0 %1625
    %1627 = vmax.xlane.f32.xlu0 %v1570
    %v1628 = vpop.xlane.xlu0 %1627
    %1629 = vmax.xlane.f32.xlu0 %v1571
    %v1630 = vpop.xlane.xlu0 %1629
    %1631 = vmax.xlane.f32.xlu0 %v1572
    %v1632 = vpop.xlane.xlu0 %1631
    %1633 = vmax.xlane.f32.xlu0 %v1573
    %v1634 = vpop.xlane.xlu0 %1633
    %1635 = vmax.xlane.f32.xlu0 %v1574
    %v1636 = vpop.xlane.xlu0 %1635
    %1637 = vmax.xlane.f32.xlu0 %v1575
    %v1638 = vpop.xlane.xlu0 %1637
    %1639 = vmax.xlane.f32.xlu0 %v1576
    %v1640 = vpop.xlane.xlu0 %1639
    %v1641 = vsub.f32 %v1545, %v1578
    %v1642 = vsub.f32 %v1546, %v1580
    %v1643 = vsub.f32 %v1547, %v1582
    %v1644 = vsub.f32 %v1548, %v1584
    %v1645 = vsub.f32 %v1549, %v1586
    %v1646 = vsub.f32 %v1550, %v1588
    %v1647 = vsub.f32 %v1551, %v1590
    %v1648 = vsub.f32 %v1552, %v1592
    %v1649 = vsub.f32 %v1553, %v1594
    %v1650 = vsub.f32 %v1554, %v1596
    %v1651 = vsub.f32 %v1555, %v1598
    %v1652 = vsub.f32 %v1556, %v1600
    %v1653 = vsub.f32 %v1557, %v1602
    %v1654 = vsub.f32 %v1558, %v1604
    %v1655 = vsub.f32 %v1559, %v1606
    %v1656 = vsub.f32 %v1560, %v1608
    %v1657 = vsub.f32 %v1561, %v1610
    %v1658 = vsub.f32 %v1562, %v1612
    %v1659 = vsub.f32 %v1563, %v1614
    %v1660 = vsub.f32 %v1564, %v1616
    %v1661 = vsub.f32 %v1565, %v1618
    %v1662 = vsub.f32 %v1566, %v1620
    %v1663 = vsub.f32 %v1567, %v1622
    %v1664 = vsub.f32 %v1568, %v1624
    %v1665 = vsub.f32 %v1569, %v1626
    %v1666 = vsub.f32 %v1570, %v1628
    %v1667 = vsub.f32 %v1571, %v1630
    %v1668 = vsub.f32 %v1572, %v1632
    %v1669 = vsub.f32 %v1573, %v1634
    %v1670 = vsub.f32 %v1574, %v1636
    %v1671 = vsub.f32 %v1575, %v1638
    %v1672 = vsub.f32 %v1576, %v1640
    %v1673 = vmul.f32 %v1641, 1.442695
    %v1674 = vpow.pop %v1673
    %v1675 = vmul.f32 %v1642, 1.442695
    %v1676 = vpow.pop %v1675
    %v1677 = vmul.f32 %v1643, 1.442695
    %v1678 = vpow.pop %v1677
    %v1679 = vmul.f32 %v1644, 1.442695
    %v1680 = vpow.pop %v1679
    %v1681 = vmul.f32 %v1645, 1.442695
    %v1682 = vpow.pop %v1681
    %v1683 = vmul.f32 %v1646, 1.442695
    %v1684 = vpow.pop %v1683
    %v1685 = vmul.f32 %v1647, 1.442695
    %v1686 = vpow.pop %v1685
    %v1687 = vmul.f32 %v1648, 1.442695
    %v1688 = vpow.pop %v1687
    %v1689 = vmul.f32 %v1649, 1.442695
    %v1690 = vpow.pop %v1689
    %v1691 = vmul.f32 %v1650, 1.442695
    %v1692 = vpow.pop %v1691
    %v1693 = vmul.f32 %v1651, 1.442695
    %v1694 = vpow.pop %v1693
    %v1695 = vmul.f32 %v1652, 1.442695
    %v1696 = vpow.pop %v1695
    %v1697 = vmul.f32 %v1653, 1.442695
    %v1698 = vpow.pop %v1697
    %v1699 = vmul.f32 %v1654, 1.442695
    %v1700 = vpow.pop %v1699
    %v1701 = vmul.f32 %v1655, 1.442695
    %v1702 = vpow.pop %v1701
    %v1703 = vmul.f32 %v1656, 1.442695
    %v1704 = vpow.pop %v1703
    %v1705 = vmul.f32 %v1657, 1.442695
    %v1706 = vpow.pop %v1705
    %v1707 = vmul.f32 %v1658, 1.442695
    %v1708 = vpow.pop %v1707
    %v1709 = vmul.f32 %v1659, 1.442695
    %v1710 = vpow.pop %v1709
    %v1711 = vmul.f32 %v1660, 1.442695
    %v1712 = vpow.pop %v1711
    %v1713 = vmul.f32 %v1661, 1.442695
    %v1714 = vpow.pop %v1713
    %v1715 = vmul.f32 %v1662, 1.442695
    %v1716 = vpow.pop %v1715
    %v1717 = vmul.f32 %v1663, 1.442695
    %v1718 = vpow.pop %v1717
    %v1719 = vmul.f32 %v1664, 1.442695
    %v1720 = vpow.pop %v1719
    %v1721 = vmul.f32 %v1665, 1.442695
    %v1722 = vpow.pop %v1721
    %v1723 = vmul.f32 %v1666, 1.442695
    %v1724 = vpow.pop %v1723
    %v1725 = vmul.f32 %v1667, 1.442695
    %v1726 = vpow.pop %v1725
    %v1727 = vmul.f32 %v1668, 1.442695
    %v1728 = vpow.pop %v1727
    %v1729 = vmul.f32 %v1669, 1.442695
    %v1730 = vpow.pop %v1729
    %v1731 = vmul.f32 %v1670, 1.442695
    %v1732 = vpow.pop %v1731
    %v1733 = vmul.f32 %v1671, 1.442695
    %v1734 = vpow.pop %v1733
    %v1735 = vmul.f32 %v1672, 1.442695
    %v1736 = vpow.pop %v1735
    %1737 = vadd.xlane.f32.xlu0 %v1674
    %v1738 = vpop.xlane.xlu0 %1737
    %1739 = vadd.xlane.f32.xlu0 %v1676
    %v1740 = vpop.xlane.xlu0 %1739
    %1741 = vadd.xlane.f32.xlu0 %v1678
    %v1742 = vpop.xlane.xlu0 %1741
    %1743 = vadd.xlane.f32.xlu0 %v1680
    %v1744 = vpop.xlane.xlu0 %1743
    %1745 = vadd.xlane.f32.xlu0 %v1682
    %v1746 = vpop.xlane.xlu0 %1745
    %1747 = vadd.xlane.f32.xlu0 %v1684
    %v1748 = vpop.xlane.xlu0 %1747
    %1749 = vadd.xlane.f32.xlu0 %v1686
    %v1750 = vpop.xlane.xlu0 %1749
    %1751 = vadd.xlane.f32.xlu0 %v1688
    %v1752 = vpop.xlane.xlu0 %1751
    %1753 = vadd.xlane.f32.xlu0 %v1690
    %v1754 = vpop.xlane.xlu0 %1753
    %1755 = vadd.xlane.f32.xlu0 %v1692
    %v1756 = vpop.xlane.xlu0 %1755
    %1757 = vadd.xlane.f32.xlu0 %v1694
    %v1758 = vpop.xlane.xlu0 %1757
    %1759 = vadd.xlane.f32.xlu0 %v1696
    %v1760 = vpop.xlane.xlu0 %1759
    %1761 = vadd.xlane.f32.xlu0 %v1698
    %v1762 = vpop.xlane.xlu0 %1761
    %1763 = vadd.xlane.f32.xlu0 %v1700
    %v1764 = vpop.xlane.xlu0 %1763
    %1765 = vadd.xlane.f32.xlu0 %v1702
    %v1766 = vpop.xlane.xlu0 %1765
    %1767 = vadd.xlane.f32.xlu0 %v1704
    %v1768 = vpop.xlane.xlu0 %1767
    %1769 = vadd.xlane.f32.xlu0 %v1706
    %v1770 = vpop.xlane.xlu0 %1769
    %1771 = vadd.xlane.f32.xlu0 %v1708
    %v1772 = vpop.xlane.xlu0 %1771
    %1773 = vadd.xlane.f32.xlu0 %v1710
    %v1774 = vpop.xlane.xlu0 %1773
    %1775 = vadd.xlane.f32.xlu0 %v1712
    %v1776 = vpop.xlane.xlu0 %1775
    %1777 = vadd.xlane.f32.xlu0 %v1714
    %v1778 = vpop.xlane.xlu0 %1777
    %1779 = vadd.xlane.f32.xlu0 %v1716
    %v1780 = vpop.xlane.xlu0 %1779
    %1781 = vadd.xlane.f32.xlu0 %v1718
    %v1782 = vpop.xlane.xlu0 %1781
    %1783 = vadd.xlane.f32.xlu0 %v1720
    %v1784 = vpop.xlane.xlu0 %1783
    %1785 = vadd.xlane.f32.xlu0 %v1722
    %v1786 = vpop.xlane.xlu0 %1785
    %1787 = vadd.xlane.f32.xlu0 %v1724
    %v1788 = vpop.xlane.xlu0 %1787
    %1789 = vadd.xlane.f32.xlu0 %v1726
    %v1790 = vpop.xlane.xlu0 %1789
    %1791 = vadd.xlane.f32.xlu0 %v1728
    %v1792 = vpop.xlane.xlu0 %1791
    %1793 = vadd.xlane.f32.xlu0 %v1730
    %v1794 = vpop.xlane.xlu0 %1793
    %1795 = vadd.xlane.f32.xlu0 %v1732
    %v1796 = vpop.xlane.xlu0 %1795
    %1797 = vadd.xlane.f32.xlu0 %v1734
    %v1798 = vpop.xlane.xlu0 %1797
    %1799 = vadd.xlane.f32.xlu0 %v1736
    %v1800 = vpop.xlane.xlu0 %1799
    %v1801 = vrcp.pop %v1738
    %v1802 = vrcp.pop %v1740
    %v1803 = vrcp.pop %v1742
    %v1804 = vrcp.pop %v1744
    %v1805 = vrcp.pop %v1746
    %v1806 = vrcp.pop %v1748
    %v1807 = vrcp.pop %v1750
    %v1808 = vrcp.pop %v1752
    %v1809 = vrcp.pop %v1754
    %v1810 = vrcp.pop %v1756
    %v1811 = vrcp.pop %v1758
    %v1812 = vrcp.pop %v1760
    %v1813 = vrcp.pop %v1762
    %v1814 = vrcp.pop %v1764
    %v1815 = vrcp.pop %v1766
    %v1816 = vrcp.pop %v1768
    %v1817 = vrcp.pop %v1770
    %v1818 = vrcp.pop %v1772
    %v1819 = vrcp.pop %v1774
    %v1820 = vrcp.pop %v1776
    %v1821 = vrcp.pop %v1778
    %v1822 = vrcp.pop %v1780
    %v1823 = vrcp.pop %v1782
    %v1824 = vrcp.pop %v1784
    %v1825 = vrcp.pop %v1786
    %v1826 = vrcp.pop %v1788
    %v1827 = vrcp.pop %v1790
    %v1828 = vrcp.pop %v1792
    %v1829 = vrcp.pop %v1794
    %v1830 = vrcp.pop %v1796
    %v1831 = vrcp.pop %v1798
    %v1832 = vrcp.pop %v1800
    %v1833 = vmul.f32 %v1674, %v1801
    %v1834 = vmul.f32 %v1676, %v1802
    %v1835 = vmul.f32 %v1678, %v1803
    %v1836 = vmul.f32 %v1680, %v1804
    %v1837 = vmul.f32 %v1682, %v1805
    %v1838 = vmul.f32 %v1684, %v1806
    %v1839 = vmul.f32 %v1686, %v1807
    %v1840 = vmul.f32 %v1688, %v1808
    %v1841 = vmul.f32 %v1690, %v1809
    %v1842 = vmul.f32 %v1692, %v1810
    %v1843 = vmul.f32 %v1694, %v1811
    %v1844 = vmul.f32 %v1696, %v1812
    %v1845 = vmul.f32 %v1698, %v1813
    %v1846 = vmul.f32 %v1700, %v1814
    %v1847 = vmul.f32 %v1702, %v1815
    %v1848 = vmul.f32 %v1704, %v1816
    %v1849 = vmul.f32 %v1706, %v1817
    %v1850 = vmul.f32 %v1708, %v1818
    %v1851 = vmul.f32 %v1710, %v1819
    %v1852 = vmul.f32 %v1712, %v1820
    %v1853 = vmul.f32 %v1714, %v1821
    %v1854 = vmul.f32 %v1716, %v1822
    %v1855 = vmul.f32 %v1718, %v1823
    %v1856 = vmul.f32 %v1720, %v1824
    %v1857 = vmul.f32 %v1722, %v1825
    %v1858 = vmul.f32 %v1724, %v1826
    %v1859 = vmul.f32 %v1726, %v1827
    %v1860 = vmul.f32 %v1728, %v1828
    %v1861 = vmul.f32 %v1730, %v1829
    %v1862 = vmul.f32 %v1732, %v1830
    %v1863 = vmul.f32 %v1734, %v1831
    %v1864 = vmul.f32 %v1736, %v1832
    %1865 = vxpose.xlu0.b32.start [1/16] %v1833, 128
    %1866 = vxpose.xlu0.b32.cont [2/16] %v1834, 128
    %1867 = vxpose.xlu0.b32.cont [3/16] %v1835, 128
    %1868 = vxpose.xlu0.b32.cont [4/16] %v1836, 128
    %1869 = vxpose.xlu0.b32.cont [5/16] %v1837, 128
    %1870 = vxpose.xlu0.b32.cont [6/16] %v1838, 128
    %1871 = vxpose.xlu0.b32.cont [7/16] %v1839, 128
    %1872 = vxpose.xlu0.b32.cont [8/16] %v1840, 128
    %1873 = vxpose.xlu0.b32.cont [9/16] %v1841, 128
    %1874 = vxpose.xlu0.b32.cont [10/16] %v1842, 128
    %1875 = vxpose.xlu0.b32.cont [11/16] %v1843, 128
    %1876 = vxpose.xlu0.b32.cont [12/16] %v1844, 128
    %1877 = vxpose.xlu0.b32.cont [13/16] %v1845, 128
    %1878 = vxpose.xlu0.b32.cont [14/16] %v1846, 128
    %1879 = vxpose.xlu0.b32.cont [15/16] %v1847, 128
    %1880 = vxpose.xlu0.b32.end [16/16] %v1848, 128
    %v1881 = vpop.trf.xlu0
    %v1882 = vpop.trf.xlu0
    %v1883 = vpop.trf.xlu0
    %v1884 = vpop.trf.xlu0
    %v1885 = vpop.trf.xlu0
    %v1886 = vpop.trf.xlu0
    %v1887 = vpop.trf.xlu0
    %v1888 = vpop.trf.xlu0
    %v1889 = vpop.trf.xlu0
    %v1890 = vpop.trf.xlu0
    %v1891 = vpop.trf.xlu0
    %v1892 = vpop.trf.xlu0
    %v1893 = vpop.trf.xlu0
    %v1894 = vpop.trf.xlu0
    %v1895 = vpop.trf.xlu0
    %v1896 = vpop.trf.xlu0
    %1897 = vst [vmem:[#allocation2] sm:$0xff] %v1881
    %1898 = vst [vmem:[#allocation2 + $0x8] sm:$0xff] %v1882
    %1899 = vst [vmem:[#allocation2 + $0x10] sm:$0xff] %v1883
    %1900 = vst [vmem:[#allocation2 + $0x18] sm:$0xff] %v1884
    %1901 = vst [vmem:[#allocation2 + $0x20] sm:$0xff] %v1885
    %1902 = vst [vmem:[#allocation2 + $0x28] sm:$0xff] %v1886
    %1903 = vst [vmem:[#allocation2 + $0x30] sm:$0xff] %v1887
    %1904 = vst [vmem:[#allocation2 + $0x38] sm:$0xff] %v1888
    %1905 = vst [vmem:[#allocation2 + $0x40] sm:$0xff] %v1889
    %1906 = vst [vmem:[#allocation2 + $0x48] sm:$0xff] %v1890
    %1907 = vst [vmem:[#allocation2 + $0x50] sm:$0xff] %v1891
    %1908 = vst [vmem:[#allocation2 + $0x58] sm:$0xff] %v1892
    %1909 = vst [vmem:[#allocation2 + $0x60] sm:$0xff] %v1893
    %1910 = vst [vmem:[#allocation2 + $0x68] sm:$0xff] %v1894
    %1911 = vst [vmem:[#allocation2 + $0x70] sm:$0xff] %v1895
    %1912 = vst [vmem:[#allocation2 + $0x78] sm:$0xff] %v1896
    %1913 = vxpose.xlu0.b32.start [1/16] %v1849, 128
    %1914 = vxpose.xlu0.b32.cont [2/16] %v1850, 128
    %1915 = vxpose.xlu0.b32.cont [3/16] %v1851, 128
    %1916 = vxpose.xlu0.b32.cont [4/16] %v1852, 128
    %1917 = vxpose.xlu0.b32.cont [5/16] %v1853, 128
    %1918 = vxpose.xlu0.b32.cont [6/16] %v1854, 128
    %1919 = vxpose.xlu0.b32.cont [7/16] %v1855, 128
    %1920 = vxpose.xlu0.b32.cont [8/16] %v1856, 128
    %1921 = vxpose.xlu0.b32.cont [9/16] %v1857, 128
    %1922 = vxpose.xlu0.b32.cont [10/16] %v1858, 128
    %1923 = vxpose.xlu0.b32.cont [11/16] %v1859, 128
    %1924 = vxpose.xlu0.b32.cont [12/16] %v1860, 128
    %1925 = vxpose.xlu0.b32.cont [13/16] %v1861, 128
    %1926 = vxpose.xlu0.b32.cont [14/16] %v1862, 128
    %1927 = vxpose.xlu0.b32.cont [15/16] %v1863, 128
    %1928 = vxpose.xlu0.b32.end [16/16] %v1864, 128
    %v1929 = vpop.trf.xlu0
    %v1930 = vpop.trf.xlu0
    %v1931 = vpop.trf.xlu0
    %v1932 = vpop.trf.xlu0
    %v1933 = vpop.trf.xlu0
    %v1934 = vpop.trf.xlu0
    %v1935 = vpop.trf.xlu0
    %v1936 = vpop.trf.xlu0
    %v1937 = vpop.trf.xlu0
    %v1938 = vpop.trf.xlu0
    %v1939 = vpop.trf.xlu0
    %v1940 = vpop.trf.xlu0
    %v1941 = vpop.trf.xlu0
    %v1942 = vpop.trf.xlu0
    %v1943 = vpop.trf.xlu0
    %v1944 = vpop.trf.xlu0
    %1945 = vst [vmem:[#allocation2 + $0x80] sm:$0xff] %v1929
    %1946 = vst [vmem:[#allocation2 + $0x88] sm:$0xff] %v1930
    %1947 = vst [vmem:[#allocation2 + $0x90] sm:$0xff] %v1931
    %1948 = vst [vmem:[#allocation2 + $0x98] sm:$0xff] %v1932
    %1949 = vst [vmem:[#allocation2 + $0xa0] sm:$0xff] %v1933
    %1950 = vst [vmem:[#allocation2 + $0xa8] sm:$0xff] %v1934
    %1951 = vst [vmem:[#allocation2 + $0xb0] sm:$0xff] %v1935
    %1952 = vst [vmem:[#allocation2 + $0xb8] sm:$0xff] %v1936
    %1953 = vst [vmem:[#allocation2 + $0xc0] sm:$0xff] %v1937
    %1954 = vst [vmem:[#allocation2 + $0xc8] sm:$0xff] %v1938
    %1955 = vst [vmem:[#allocation2 + $0xd0] sm:$0xff] %v1939
    %1956 = vst [vmem:[#allocation2 + $0xd8] sm:$0xff] %v1940
    %1957 = vst [vmem:[#allocation2 + $0xe0] sm:$0xff] %v1941
    %1958 = vst [vmem:[#allocation2 + $0xe8] sm:$0xff] %v1942
    %1959 = vst [vmem:[#allocation2 + $0xf0] sm:$0xff] %v1943
    %1960 = vst [vmem:[#allocation2 + $0xf8] sm:$0xff] %v1944
    // Predicated region
    $region22: #{tpu_custom_call.1} parent=1 // pred_check
      _
    $region23: #{tpu_custom_call.1} parent=1 // pred_check_branch
      %1962 = sbr.rel (0) target = $region25
    $region24: #{tpu_custom_call.1} parent=1 // pred_region
      %s1964 = ssub.s32 4096, 4096
      %1965 = vsyncadd [#allocation3], %s1964
      %s1966 = sshll.u32 [#allocation2], 4
      %s1967 = int_to_ptr.vmem [resolvable:$true] %s1966
      %1972 = dma.vmem_to_hbm [thread:$0]  %s1967, 4096, %s5, [#allocation3], 128, 128, 8
    $region25: #{tpu_custom_call.1} parent=1 // pred_fallthru
      _
    // Predicated region
    $region26: #{tpu_custom_call.1} parent=1 // pred_check
      _
    $region27: #{tpu_custom_call.1} parent=1 // pred_check_branch
      %1974 = sbr.rel (0) target = $region29
    $region28: #{tpu_custom_call.1} parent=1 // pred_region
      %1975 = dma.done [#allocation3], 4096
    $region29: #{tpu_custom_call.1} parent=1 // pred_fallthru
      _
    %1976 = vsyncpa [#allocation3], 1

</llo_original>
